<compile_context>
chip_gen: v7x
topology: tpu7x:2x2x1
jax: 0.10.0
libtpu: 0.0.40
codegen_flags: <defaults>
</compile_context>

<pallas_src>
import functools
import math

import numpy as np
import jax
import jax.numpy as jnp
from jax import lax
from jax.experimental import pallas as pl
from jax.experimental.pallas import tpu as pltpu

F32 = jnp.float32
_VMEM_LIMIT = 48 * 1024 * 1024     # explicit limit (> default, < v7x physical)
_ROW_BLOCK = 512                   # rows per tile for M-tiled pointwise kernels


def _cparams(sem):
    return pltpu.CompilerParams(dimension_semantics=sem,
                                vmem_limit_bytes=_VMEM_LIMIT)


def _row_grid(M):
    bm = M if M <= _ROW_BLOCK else _ROW_BLOCK
    return bm, pl.cdiv(M, bm)


# ----------------------------------------------------------------------------
# Pallas kernels
# ----------------------------------------------------------------------------
def pointwise_kernel(x_ref, w_ref, s_ref, b_ref, o_ref, *, relu):
    """o = act((x @ w) * s + b); x:(bm,Cin) w:(Cin,Cout) s,b:(1,Cout)."""
    y = jnp.dot(x_ref[...], w_ref[...], preferred_element_type=F32)
    y = y * s_ref[...] + b_ref[...]
    if relu:
        y = jnp.maximum(y, 0.0)
    o_ref[...] = y


def gcn_attn_kernel(fab_ref, x_ref, adjT_ref, z_ref, *, inv_r, num_subset):
    """AGCN attention + aggregation for all subsets, one batch per grid step.

    fab : (1, 2*ns, V, T*ic)  -- [theta_0..2, phi_0..2] embeddings
    x   : (1, T, V, C)        -- input features (channels-last, resident once)
    adjT: (ns, V, V)          -- (A[i] + PA[i])^T
    z   : (1, T, V, ns*C)     -- per-subset aggregated features, stacked on C
    """
    x0 = x_ref[0]                                   # (T, V, C)
    T, V, _ = x0.shape
    zs = []
    for i in range(num_subset):
        fa = fab_ref[0, i]                          # (V, T*ic)
        fb = fab_ref[0, num_subset + i]             # (V, T*ic)
        # St[vb, va] = S[va, vb] = sum_k fa[va,k] fb[vb,k] / (ic*T)
        st = lax.dot_general(fb, fa, (((1,), (1,)), ((), ())),
                             preferred_element_type=F32) * inv_r
        # softmax over va (dim -2 of S == last dim of St)
        st = st - jnp.max(st, axis=-1, keepdims=True)
        e = jnp.exp(st)
        p = e / jnp.sum(e, axis=-1, keepdims=True)
        attn_t = p + adjT_ref[i]                    # (vb, va)
        attn_b = jnp.broadcast_to(attn_t[None, :, :], (T, V, V))
        # z_i[t, vb, c] = sum_va attn[va, vb] * x[t, va, c]
        zs.append(jnp.einsum('twv,tvc->twc', attn_b, x0,
                             preferred_element_type=F32))
    z_ref[0] = jnp.concatenate(zs, axis=-1)


def gcn_out_kernel(z_ref, x_ref, wd_ref, s_ref, b_ref, o_ref):
    """Stacked conv_d + BN + identity residual + ReLU (rows tiled)."""
    y = jnp.dot(z_ref[...], wd_ref[...], preferred_element_type=F32)
    y = y * s_ref[...] + b_ref[...]
    o_ref[...] = jnp.maximum(y + x_ref[...], 0.0)


def gcn_out_down_kernel(z_ref, x_ref, wd_ref, s_ref, b_ref,
                        wdn_ref, ds_ref, db_ref, o_ref):
    """Stacked conv_d + BN + (1x1 conv + BN) residual + ReLU (rows tiled)."""
    y = jnp.dot(z_ref[...], wd_ref[...], preferred_element_type=F32)
    y = y * s_ref[...] + b_ref[...]
    d = jnp.dot(x_ref[...], wdn_ref[...], preferred_element_type=F32)
    d = d * ds_ref[...] + db_ref[...]
    o_ref[...] = jnp.maximum(y + d, 0.0)


def pyconv2_kernel(x_ref, w1_ref, w2_ref, s1_ref, b1_ref, s2_ref, b2_ref,
                   o_ref, *, K1, K2, T, pad):
    """PyConv2: two temporal convs (the grouped one as a block-diagonal dense
    weight), K taps folded into one matmul each, BN + ReLU fused.
    One batch per grid step.

    x : (1, T+2*pad, V, Cin)   w1 : (K1*Cin, half)   w2 : (K2*Cin, half)
    o : (1, T, V, 2*half)
    """
    V = x_ref.shape[2]
    Cin = x_ref.shape[3]
    half = w1_ref.shape[1]

    def branch(w_ref, K, s_ref, b_ref):
        off = pad - (K - 1) // 2
        taps = [x_ref[0, off + k:off + k + T] for k in range(K)]  # (T,V,Cin) each
        xs = jnp.concatenate(taps, axis=-1).reshape(T * V, K * Cin)
        y = jnp.dot(xs, w_ref[...], preferred_element_type=F32)
        return jnp.maximum(y * s_ref[...] + b_ref[...], 0.0)

    y1 = branch(w1_ref, K1, s1_ref, b1_ref)
    y2 = branch(w2_ref, K2, s2_ref, b2_ref)
    o_ref[0] = jnp.concatenate([y1, y2], axis=-1).reshape(T, V, 2 * half)


def vov_tail_kernel(*refs, T, has_down):
    """Fused VoV tail: concat([x, h0, h1, h2]) 1x1 conv (as an accumulation
    over channel segments) + BN + ReLU, FCA channel attention, residual add
    (identity or 1x1-conv+BN down) and the final ReLU.
    One batch per grid step; the concatenated tensor never materializes.
    """
    if has_down:
        (x1_ref, h0_ref, h1_ref, h2_ref, w0_ref, w1_ref, w2_ref, w3_ref,
         cs_ref, cb_ref, dct_ref, f1_ref, f2_ref,
         wd_ref, ds_ref, db_ref, o_ref) = refs
    else:
        (x1_ref, h0_ref, h1_ref, h2_ref, w0_ref, w1_ref, w2_ref, w3_ref,
         cs_ref, cb_ref, dct_ref, f1_ref, f2_ref, o_ref) = refs

    V = x1_ref.shape[2]
    OC = w0_ref.shape[1]
    x1 = x1_ref[0].reshape(T * V, x1_ref.shape[3])

    # concat-conv as an accumulation over the four channel segments
    y = jnp.dot(x1, w0_ref[...], preferred_element_type=F32)
    y = y + jnp.dot(h0_ref[0].reshape(T * V, h0_ref.shape[3]), w1_ref[...],
                    preferred_element_type=F32)
    y = y + jnp.dot(h1_ref[0].reshape(T * V, h1_ref.shape[3]), w2_ref[...],
                    preferred_element_type=F32)
    y = y + jnp.dot(h2_ref[0].reshape(T * V, h2_ref.shape[3]), w3_ref[...],
                    preferred_element_type=F32)
    y = jnp.maximum(y * cs_ref[...] + cb_ref[...], 0.0)        # (T*V, OC)
    y3 = y.reshape(T, V, OC)

    # FCA: DCT-weighted pooling + 2-layer bottleneck + sigmoid gate
    pooled = jnp.sum(jnp.sum(y3 * dct_ref[...], axis=0), axis=0, keepdims=True)
    h = jnp.maximum(jnp.dot(pooled, f1_ref[...], preferred_element_type=F32),
                    0.0)
    a = jax.nn.sigmoid(jnp.dot(h, f2_ref[...], preferred_element_type=F32))
    out = y3 * a.reshape(1, 1, OC)

    # residual + final ReLU
    if has_down:
        res = jnp.dot(x1, wd_ref[...], preferred_element_type=F32)
        res = (res * ds_ref[...] + db_ref[...]).reshape(T, V, OC)
    else:
        res = x1_ref[0]
    o_ref[0] = jnp.maximum(out + res, 0.0)


# ----------------------------------------------------------------------------
# pallas_call wrappers
# ----------------------------------------------------------------------------
def pw(x_cl, w, scale, bias, relu):
    """1x1 conv (+folded BN) + optional ReLU, tiled over rows."""
    shape = x_cl.shape
    Cin = shape[-1]
    Cout = w.shape[1]
    x2 = x_cl.reshape(-1, Cin)
    M = x2.shape[0]
    bm, gm = _row_grid(M)
    kern = functools.partial(pointwise_kernel, relu=relu)
    y = pl.pallas_call(
        kern,
        grid=(gm,),
        out_shape=jax.ShapeDtypeStruct((M, Cout), F32),
        in_specs=[
            pl.BlockSpec((bm, Cin), lambda i: (i, 0)),
            pl.BlockSpec((Cin, Cout), lambda i: (0, 0)),
            pl.BlockSpec((1, Cout), lambda i: (0, 0)),
            pl.BlockSpec((1, Cout), lambda i: (0, 0)),
        ],
        out_specs=pl.BlockSpec((bm, Cout), lambda i: (i, 0)),
        compiler_params=_cparams(("parallel",)),
    )(x2, w, scale.reshape(1, Cout), bias.reshape(1, Cout))
    return y.reshape(shape[:-1] + (Cout,))


def gcn_attn(fab_r, x_cl, adjT, ic):
    N, T, V, C = x_cl.shape
    ns = adjT.shape[0]
    K = T * ic
    kern = functools.partial(gcn_attn_kernel, inv_r=1.0 / float(K),
                             num_subset=ns)
    return pl.pallas_call(
        kern,
        grid=(N,),
        out_shape=jax.ShapeDtypeStruct((N, T, V, ns * C), F32),
        in_specs=[
            pl.BlockSpec((1, 2 * ns, V, K), lambda n: (n, 0, 0, 0)),
            pl.BlockSpec((1, T, V, C), lambda n: (n, 0, 0, 0)),
            pl.BlockSpec((ns, V, V), lambda n: (0, 0, 0)),
        ],
        out_specs=pl.BlockSpec((1, T, V, ns * C), lambda n: (n, 0, 0, 0)),
        compiler_params=_cparams(("parallel",)),
    )(fab_r, x_cl, adjT)


def gcn_out(z_all, x_cl, p):
    N, T, V, Cin = x_cl.shape
    OC = p['wd_stack'].shape[1]
    M = N * T * V
    z2 = z_all.reshape(M, -1)
    x2 = x_cl.reshape(M, Cin)
    Kd = z2.shape[1]
    bm, gm = _row_grid(M)
    s = p['bn_scale_eff'].reshape(1, OC)
    b = p['bn_bias_eff'].reshape(1, OC)
    if 'wdown' in p:
        y = pl.pallas_call(
            gcn_out_down_kernel,
            grid=(gm,),
            out_shape=jax.ShapeDtypeStruct((M, OC), F32),
            in_specs=[
                pl.BlockSpec((bm, Kd), lambda i: (i, 0)),
                pl.BlockSpec((bm, Cin), lambda i: (i, 0)),
                pl.BlockSpec((Kd, OC), lambda i: (0, 0)),
                pl.BlockSpec((1, OC), lambda i: (0, 0)),
                pl.BlockSpec((1, OC), lambda i: (0, 0)),
                pl.BlockSpec((Cin, OC), lambda i: (0, 0)),
                pl.BlockSpec((1, OC), lambda i: (0, 0)),
                pl.BlockSpec((1, OC), lambda i: (0, 0)),
            ],
            out_specs=pl.BlockSpec((bm, OC), lambda i: (i, 0)),
            compiler_params=_cparams(("parallel",)),
        )(z2, x2, p['wd_stack'], s, b, p['wdown'],
          p['down_scale'].reshape(1, OC), p['down_bias'].reshape(1, OC))
    else:
        y = pl.pallas_call(
            gcn_out_kernel,
            grid=(gm,),
            out_shape=jax.ShapeDtypeStruct((M, OC), F32),
            in_specs=[
                pl.BlockSpec((bm, Kd), lambda i: (i, 0)),
                pl.BlockSpec((bm, Cin), lambda i: (i, 0)),
                pl.BlockSpec((Kd, OC), lambda i: (0, 0)),
                pl.BlockSpec((1, OC), lambda i: (0, 0)),
                pl.BlockSpec((1, OC), lambda i: (0, 0)),
            ],
            out_specs=pl.BlockSpec((bm, OC), lambda i: (i, 0)),
            compiler_params=_cparams(("parallel",)),
        )(z2, x2, p['wd_stack'], s, b)
    return y.reshape(N, T, V, OC)


def pyconv2(x_cl, p, K1, K2):
    N, T, V, Cin = x_cl.shape
    half = p['w1d'].shape[1]
    pad = (max(K1, K2) - 1) // 2
    xp = jnp.pad(x_cl, ((0, 0), (pad, pad), (0, 0), (0, 0)))    # one pad / level
    Tp = T + 2 * pad
    kern = functools.partial(pyconv2_kernel, K1=K1, K2=K2, T=T, pad=pad)
    return pl.pallas_call(
        kern,
        grid=(N,),
        out_shape=jax.ShapeDtypeStruct((N, T, V, 2 * half), F32),
        in_specs=[
            pl.BlockSpec((1, Tp, V, Cin), lambda n: (n, 0, 0, 0)),
            pl.BlockSpec((K1 * Cin, half), lambda n: (0, 0)),
            pl.BlockSpec((K2 * Cin, half), lambda n: (0, 0)),
            pl.BlockSpec((1, half), lambda n: (0, 0)),
            pl.BlockSpec((1, half), lambda n: (0, 0)),
            pl.BlockSpec((1, half), lambda n: (0, 0)),
            pl.BlockSpec((1, half), lambda n: (0, 0)),
        ],
        out_specs=pl.BlockSpec((1, T, V, 2 * half), lambda n: (n, 0, 0, 0)),
        compiler_params=_cparams(("parallel",)),
    )(xp, p['w1d'], p['w2d'],
      p['s1'].reshape(1, half), p['b1'].reshape(1, half),
      p['s2'].reshape(1, half), p['b2'].reshape(1, half))


def vov_tail(x1s, h0s, h1s, h2s, p, down):
    N, T, V, OC = x1s.shape
    sc = h0s.shape[-1]
    Cr = p['fc1'].shape[1]
    wc = p['w_cat']
    w0 = wc[:OC]
    w1 = wc[OC:OC + sc]
    w2 = wc[OC + sc:OC + 2 * sc]
    w3 = wc[OC + 2 * sc:]
    has_down = down is not None
    kern = functools.partial(vov_tail_kernel, T=T, has_down=has_down)

    args = [x1s, h0s, h1s, h2s, w0, w1, w2, w3,
            p['cat_scale'].reshape(1, OC), p['cat_bias'].reshape(1, OC),
            p['dct'], p['fc1'], p['fc2']]
    in_specs = [
        pl.BlockSpec((1, T, V, OC), lambda n: (n, 0, 0, 0)),
        pl.BlockSpec((1, T, V, sc), lambda n: (n, 0, 0, 0)),
        pl.BlockSpec((1, T, V, sc), lambda n: (n, 0, 0, 0)),
        pl.BlockSpec((1, T, V, sc), lambda n: (n, 0, 0, 0)),
        pl.BlockSpec((OC, OC), lambda n: (0, 0)),
        pl.BlockSpec((sc, OC), lambda n: (0, 0)),
        pl.BlockSpec((sc, OC), lambda n: (0, 0)),
        pl.BlockSpec((sc, OC), lambda n: (0, 0)),
        pl.BlockSpec((1, OC), lambda n: (0, 0)),
        pl.BlockSpec((1, OC), lambda n: (0, 0)),
        pl.BlockSpec((T, V, OC), lambda n: (0, 0, 0)),
        pl.BlockSpec((OC, Cr), lambda n: (0, 0)),
        pl.BlockSpec((Cr, OC), lambda n: (0, 0)),
    ]
    if has_down:
        args += [down['w'], down['scale'].reshape(1, OC),
                 down['bias'].reshape(1, OC)]
        in_specs += [
            pl.BlockSpec((OC, OC), lambda n: (0, 0)),
            pl.BlockSpec((1, OC), lambda n: (0, 0)),
            pl.BlockSpec((1, OC), lambda n: (0, 0)),
        ]
    return pl.pallas_call(
        kern,
        grid=(N,),
        out_shape=jax.ShapeDtypeStruct((N, T, V, OC), F32),
        in_specs=in_specs,
        out_specs=pl.BlockSpec((1, T, V, OC), lambda n: (n, 0, 0, 0)),
        compiler_params=_cparams(("parallel",)),
    )(*args)


# ----------------------------------------------------------------------------
# Module forward passes
# ----------------------------------------------------------------------------
def unit_gcn_forward(x_cl, p, A):
    N, T, V, C = x_cl.shape
    ic = p['ic']
    ns = A.shape[0]
    # stacked theta/phi embeddings for all subsets: single matmul over x
    ones_ab = jnp.ones((2 * ns * ic,), F32)
    fab = pw(x_cl, p['wab'], ones_ab, p['bab'], relu=False)      # (N,T,V,2*ns*ic)
    # rearrange to (N, 2*ns, V, T*ic) for per-subset attention (one transpose)
    fab_r = fab.reshape(N, T, V, 2 * ns, ic)
    fab_r = jnp.transpose(fab_r, (0, 3, 2, 1, 4)).reshape(N, 2 * ns, V, T * ic)
    adjT = jnp.swapaxes(A + p['PA'], -1, -2)                     # (ns, V, V)
    # per-batch attention + aggregation for all subsets (x resident once)
    z_all = gcn_attn(fab_r, x_cl, adjT, ic)                      # (N,T,V,ns*C)
    # stacked conv_d + BN + residual(+down) + ReLU, tiled over rows
    return gcn_out(z_all, x_cl, p)


def tcn_vov_forward(x1, p, down, stride):
    h0 = pw(x1, p['w_l0'], p['l0_scale'], p['l0_bias'], relu=True)
    h1 = pyconv2(h0, p['py1'], 3, 5)
    h2 = pyconv2(h1, p['py2'], 7, 9)
    if stride > 1:
        x1s, h0s, h1s, h2s = (t[:, ::stride] for t in (x1, h0, h1, h2))
    else:
        x1s, h0s, h1s, h2s = x1, h0, h1, h2
    return vov_tail(x1s, h0s, h1s, h2s, p, down)


def tcn_gcn_unit_forward(x_cl, params, A, stride=1):
    x1 = unit_gcn_forward(x_cl, params['gcn'], A)
    return tcn_vov_forward(x1, params['vov'], params.get('down'), stride)


# ----------------------------------------------------------------------------
# Deterministic parameter construction (inference-mode BN folded)
# ----------------------------------------------------------------------------
def build_dct_filter(T, V, C):
    # FcaNet 'top16' frequency indices on a 7x7 grid, rescaled to (T, V).
    mx = [0, 0, 6, 0, 0, 1, 1, 4, 5, 1, 3, 0, 0, 0, 3, 2]
    my = [0, 1, 0, 5, 2, 0, 2, 0, 0, 6, 0, 4, 6, 3, 5, 2]
    mapper_x = [u * (T // 7) for u in mx]
    mapper_y = [v * (V // 7) for v in my]
    num = len(mx)
    assert C % num == 0, "channels must be divisible by 16 for top16 FCA"
    c_part = C // num

    def bf(pos, freq, n):
        r = math.cos(math.pi * freq * (pos + 0.5) / n) / math.sqrt(n)
        return r if freq == 0 else r * math.sqrt(2.0)

    filt = np.zeros((T, V, C), np.float32)
    for i, (ux, vy) in enumerate(zip(mapper_x, mapper_y)):
        for tx in range(T):
            wx = bf(tx, ux, T)
            for ty in range(V):
                filt[tx, ty, i * c_part:(i + 1) * c_part] = wx * bf(ty, vy, V)
    return jnp.asarray(filt)


def dense_grouped_weight(w_g, K, Cin, groups):
    """(groups, K, Cin//groups, Coutg) -> block-diagonal dense (K*Cin, Cout)
    matching an im2col layout whose column index is k*Cin + c."""
    cing = Cin // groups
    coutg = w_g.shape[-1]
    w = jnp.zeros((K * Cin, groups * coutg), F32)
    for g in range(groups):
        for k in range(K):
            w = w.at[k * Cin + g * cing:k * Cin + (g + 1) * cing,
                     g * coutg:(g + 1) * coutg].set(w_g[g, k])
    return w


def init_params(key, C_in, OC, V, T, stride=1):
    keys = iter(jax.random.split(key, 256))

    def nrm(shape, s=0.1):
        return (s * jax.random.normal(next(keys), shape)).astype(F32)

    def bn_affine(ch):
        gamma = 1.0 + nrm((ch,))
        beta = nrm((ch,))
        rmean = nrm((ch,))
        rvar = 1.0 + jnp.abs(nrm((ch,)))
        scale = gamma / jnp.sqrt(rvar + 1e-5)
        bias = beta - rmean * scale
        return scale, bias

    ns = 3
    # ---- unit_gcn ----
    ic = OC // 4
    gcn = dict(ic=ic)
    gcn['PA'] = jnp.full((ns, V, V), 1e-6, F32)
    # stacked theta/phi weights: output channels [a_0, a_1, a_2, b_0, b_1, b_2]
    gcn['wab'] = nrm((C_in, 2 * ns * ic))
    gcn['bab'] = nrm((2 * ns * ic,), 0.01)
    # stacked conv_d weights: rows [subset 0 | subset 1 | subset 2]
    gcn['wd_stack'] = nrm((ns * C_in, OC))
    bd_sum = nrm((OC,), 0.01)               # sum of the 3 conv_d biases
    bn_s, bn_b = bn_affine(OC)
    gcn['bn_scale_eff'] = bn_s
    gcn['bn_bias_eff'] = bd_sum * bn_s + bn_b
    if C_in != OC:
        wdn, bdn = nrm((C_in, OC)), nrm((OC,), 0.01)
        ds, db = bn_affine(OC)
        gcn['wdown'] = wdn
        gcn['down_scale'] = ds
        gcn['down_bias'] = bdn * ds + db

    # ---- tcn_vov ----
    sc = OC // 2
    half = sc // 2

    def pyconv_params(cin, k1, k2, g2):
        # branch 1: dense conv (groups=1); branch 2: grouped conv (groups=g2)
        w1 = nrm((k1, cin, half)).reshape(k1 * cin, half)
        w2g = nrm((g2, k2, cin // g2, half // g2))
        w2 = dense_grouped_weight(w2g, k2, cin, g2)
        b1 = nrm((half,), 0.01)
        b2 = nrm((half,), 0.01)
        s, b = bn_affine(sc)
        return dict(w1d=w1, w2d=w2,
                    s1=s[:half], b1=b1 * s[:half] + b[:half],
                    s2=s[half:], b2=b2 * s[half:] + b[half:])

    vov = {}
    vov['w_l0'] = nrm((OC, sc))
    vov['l0_scale'], vov['l0_bias'] = bn_affine(sc)
    vov['py1'] = pyconv_params(sc, 3, 5, 4)
    vov['py2'] = pyconv_params(sc, 7, 9, 4)
    vov['w_cat'] = nrm((OC + 3 * sc, OC))
    vov['cat_scale'], vov['cat_bias'] = bn_affine(OC)
    T_out = (T + stride - 1) // stride
    vov['dct'] = build_dct_filter(T_out, V, OC)
    vov['fc1'] = nrm((OC, OC // 4))
    vov['fc2'] = nrm((OC // 4, OC))

    params = dict(gcn=gcn, vov=vov)

    # ---- residual unit_tcn (only used for stride == 2) ----
    if stride == 2:
        wtd, btd = nrm((OC, OC)), nrm((OC,), 0.01)
        ts, tb = bn_affine(OC)
        params['down'] = dict(w=wtd, scale=ts, bias=btd * ts + tb)
    return params


# ----------------------------------------------------------------------------
if __name__ == "__main__":
    N, C_in, T, V = 2, 3, 16, 25        # NTU-style: 3 coords, 25 joints
    OC = 16                             # out_channels (multiple of 16 for FCA top16)
    stride = 1

    key = jax.random.PRNGKey(0)
    kx, ka, kp = jax.random.split(key, 3)
    x_nchw = jax.random.normal(kx, (N, C_in, T, V), F32)        # PyTorch NCHW input
    A_raw = jax.random.uniform(ka, (3, V, V), F32)
    A = A_raw / jnp.sum(A_raw, axis=1, keepdims=True)           # (num_subset, V, V)

    params = init_params(kp, C_in, OC, V, T, stride)

    x_cl = jnp.transpose(x_nchw, (0, 2, 3, 1))                  # -> (N, T, V, C)
    out = tcn_gcn_unit_forward(x_cl, params, A, stride=stride)
    out = jax.block_until_ready(out)

    T_out = (T + stride - 1) // stride
    assert out.shape == (N, T_out, V, OC), out.shape
    assert bool(jnp.all(jnp.isfinite(out)))
    print("KERNEL_OK")
</pallas_src>

<mosaic_0001>
module attributes {stable_mosaic.version = 11 : i64} {
  func.func @pointwise_kernel(%arg0: i32, %arg1: memref<512x3xf32, #tpu.memory_space<vmem>>, %arg2: memref<3x24xf32, #tpu.memory_space<vmem>>, %arg3: memref<1x24xf32, #tpu.memory_space<vmem>>, %arg4: memref<1x24xf32, #tpu.memory_space<vmem>>, %arg5: memref<512x24xf32, #tpu.memory_space<vmem>>) attributes {dimension_semantics = [#tpu.dimension_semantics<parallel>], iteration_bounds = array<i64: 2>, scalar_prefetch = 0 : i64, scratch_operands = 0 : i64, tpu.core_type = #tpu.core_type<tc>, window_params = [{transform_indices = @transform_0, window_bounds = array<i64: 512, 3>}, {pipeline_mode = #tpu.pipeline_mode<synchronous>, transform_indices = @transform_1, window_bounds = array<i64: 3, 24>}, {pipeline_mode = #tpu.pipeline_mode<synchronous>, transform_indices = @transform_2, window_bounds = array<i64: 1, 24>}, {pipeline_mode = #tpu.pipeline_mode<synchronous>, transform_indices = @transform_3, window_bounds = array<i64: 1, 24>}, {transform_indices = @transform_4, window_bounds = array<i64: 512, 24>}]} {
    %c0 = arith.constant 0 : index
    %c0_0 = arith.constant 0 : index
    %0 = vector.load %arg1[%c0, %c0_0] : memref<512x3xf32, #tpu.memory_space<vmem>>, vector<512x3xf32>
    %c0_1 = arith.constant 0 : index
    %c0_2 = arith.constant 0 : index
    %1 = vector.load %arg2[%c0_1, %c0_2] : memref<3x24xf32, #tpu.memory_space<vmem>>, vector<3x24xf32>
    %cst = arith.constant dense<0.000000e+00> : vector<512x24xf32>
    %2 = tpu.matmul %0, %1, %cst {dimension_numbers = #tpu.dot_dimension_numbers<[1], [0], [0], [1], [0, 0, 1, 1], [], []>} : vector<512x3xf32>, vector<3x24xf32>, vector<512x24xf32> -> vector<512x24xf32>
    %c0_3 = arith.constant 0 : index
    %c0_4 = arith.constant 0 : index
    %3 = vector.load %arg3[%c0_3, %c0_4] : memref<1x24xf32, #tpu.memory_space<vmem>>, vector<1x24xf32>
    %4 = vector.broadcast %3 : vector<1x24xf32> to vector<512x24xf32>
    %5 = arith.mulf %2, %4 : vector<512x24xf32>
    %c0_5 = arith.constant 0 : index
    %c0_6 = arith.constant 0 : index
    %6 = vector.load %arg4[%c0_5, %c0_6] : memref<1x24xf32, #tpu.memory_space<vmem>>, vector<1x24xf32>
    %7 = vector.broadcast %6 : vector<1x24xf32> to vector<512x24xf32>
    %8 = arith.addf %5, %7 : vector<512x24xf32>
    %c0_7 = arith.constant 0 : index
    %c0_8 = arith.constant 0 : index
    %9 = vector.load %arg5[%c0_7, %c0_8] : memref<512x24xf32, #tpu.memory_space<vmem>>, vector<512x24xf32>
    tpu.vector_store %arg5[%c0_7, %c0_8], %8 {strides = array<i32>} : memref<512x24xf32, #tpu.memory_space<vmem>>, vector<512x24xf32>,
    return
  }
  func.func @transform_0(%arg0: i32) -> (i32, i32) {
    %c0_i32 = arith.constant 0 : i32
    %c0_i32_0 = arith.constant 0 : i32
    return %arg0, %c0_i32 : i32, i32
  }
  func.func @transform_1(%arg0: i32) -> (i32, i32) {
    %c0_i32 = arith.constant 0 : i32
    %c0_i32_0 = arith.constant 0 : i32
    %c0_i32_1 = arith.constant 0 : i32
    return %c0_i32, %c0_i32_0 : i32, i32
  }
  func.func @transform_2(%arg0: i32) -> (i32, i32) {
    %c0_i32 = arith.constant 0 : i32
    %c0_i32_0 = arith.constant 0 : i32
    %c0_i32_1 = arith.constant 0 : i32
    return %c0_i32, %c0_i32_0 : i32, i32
  }
  func.func @transform_3(%arg0: i32) -> (i32, i32) {
    %c0_i32 = arith.constant 0 : i32
    %c0_i32_0 = arith.constant 0 : i32
    %c0_i32_1 = arith.constant 0 : i32
    return %c0_i32, %c0_i32_0 : i32, i32
  }
  func.func @transform_4(%arg0: i32) -> (i32, i32) {
    %c0_i32 = arith.constant 0 : i32
    %c0_i32_0 = arith.constant 0 : i32
    return %arg0, %c0_i32 : i32, i32
  }
}

</mosaic_0001>

<llo_original>
// kernel: tpu_custom_call.1
$region0: #{tpu_custom_call.1}
  #allocation0 [shape = 'u32[]', space=smem, size = 0x4, offset = 0x4, fixed_abs, tag = 'smem constant byte address 0x4 - core index']
  #allocation1 [shape = 'u32[144,128]{1,0:T(1,128)}', space=vmem, size = 0x12000, scoped, tag = 'internal scratch']
  %s0 = inlined_call_operand.vmem [shape: f32[800,3], index: 0, kind: input, shape index: {}]
  %s1 = inlined_call_operand.vmem [shape: f32[3,24], index: 1, kind: input, shape index: {}]
  %s2 = inlined_call_operand.vmem [shape: f32[1,24], index: 2, kind: input, shape index: {}]
  %s3 = inlined_call_operand.vmem [shape: f32[1,24], index: 3, kind: input, shape index: {}]
  %s4 = inlined_call_operand.vmem [shape: f32[800,24], index: 4, kind: output, shape index: {}]
  %s5 = sld [smem:[#allocation0]]
  $region97: #{tpu_custom_call.1} parent=0
    _
  %s7 = ssub.s32 1, %s5
  %s8 = scalar_select 0, %s7, %s5
  $region1: #{tpu_custom_call.1} parent=0
    #allocation2 [shape = 'u8[524288]{0}', space=vmem, size = 0x80000, scoped, tag = 'output window, operand 0']
    loop: start=0, step=1, limit=4
    $region2: #{tpu_custom_call.1} parent=1 // loop_pre_header
      _
    $region3: #{tpu_custom_call.1} parent=1 // loop_header
      %s10 = sphi 0, %s14
      %p11 = scmp.ge.s32.totalorder %s10, 4
      %s20 = sphi 0, %s22
      %s23 = sphi 0, %s20
      %s24 = sphi 0, %s23
      %s40 = sphi 0, %s24
      %s44 = sphi 0, %s44
      %s46 = sphi 0, %s44
      %s47 = sphi 0, %s46
      %s61 = sphi 0, %s47
      %s65 = sphi 0, %s65
      %s67 = sphi 0, %s65
      %s68 = sphi 0, %s67
      %s82 = sphi 0, %s68
      %s86 = sphi 0, %s86
      %s88 = sphi 0, %s86
      %s89 = sphi 0, %s88
      %s103 = sphi 0, %s89
      %s109 = sphi 0, %s111
      %s112 = sphi 0, %s109
      %s113 = sphi 0, %s112
      %s129 = sphi 0, %s113
    $region4: #{tpu_custom_call.1} parent=1 // loop_header_branch
      %13 = sbr.rel (%p11) target = $region8
    $region5: #{tpu_custom_call.1} parent=1 // loop_body
      %s15 = ssub.s32 %s10, 1
      %s16 = ssub.s32 %s10, 2
      %s17 = sadd.s32 %s10, 1
      %s18 = ssub.s32 %s10, %s17
      %p19 = scmp.eq.s32.totalorder %s18, 0
      %s21 = sadd.s32 %s20, 1
      %s22 = scalar_select %p19, %s20, %s21
      %p25 = pneg %p19
      %p26 = scmp.eq.s32.totalorder %s10, 1
      %p27 = por %p25, %p26
      %p28 = scmp.ne.s32.totalorder %s20, %s23
      %p29 = scmp.eq.s32.totalorder %s10, 0
      %p30 = por %p28, %p29
      %p31 = scmp.ne.s32.totalorder %s20, %s23
      %p32 = scmp.eq.s32.totalorder %s15, 1
      %p33 = por %p31, %p32
      %p34 = scmp.ne.s32.totalorder %s23, %s24
      %p35 = scmp.eq.s32.totalorder %s15, 0
      %p36 = por %p34, %p35
      %p37 = scmp.ne.s32.totalorder %s23, %s24
      %p38 = scmp.eq.s32.totalorder %s16, 1
      %p39 = por %p37, %p38
      %p41 = scmp.ne.s32.totalorder %s24, %s40
      %p42 = scmp.eq.s32.totalorder %s16, 0
      %p43 = por %p41, %p42
      %s45 = sadd.s32 %s44, 1
      %p48 = scmp.eq.s32.totalorder %s10, 1
      %p49 = scmp.ne.s32.totalorder %s44, %s46
      %p50 = scmp.eq.s32.totalorder %s10, 0
      %p51 = por %p49, %p50
      %p52 = scmp.ne.s32.totalorder %s44, %s46
      %p53 = scmp.eq.s32.totalorder %s15, 1
      %p54 = por %p52, %p53
      %p55 = scmp.ne.s32.totalorder %s46, %s47
      %p56 = scmp.eq.s32.totalorder %s15, 0
      %p57 = por %p55, %p56
      %p58 = scmp.ne.s32.totalorder %s46, %s47
      %p59 = scmp.eq.s32.totalorder %s16, 1
      %p60 = por %p58, %p59
      %p62 = scmp.ne.s32.totalorder %s47, %s61
      %p63 = scmp.eq.s32.totalorder %s16, 0
      %p64 = por %p62, %p63
      %s66 = sadd.s32 %s65, 1
      %p69 = scmp.eq.s32.totalorder %s10, 1
      %p70 = scmp.ne.s32.totalorder %s65, %s67
      %p71 = scmp.eq.s32.totalorder %s10, 0
      %p72 = por %p70, %p71
      %p73 = scmp.ne.s32.totalorder %s65, %s67
      %p74 = scmp.eq.s32.totalorder %s15, 1
      %p75 = por %p73, %p74
      %p76 = scmp.ne.s32.totalorder %s67, %s68
      %p77 = scmp.eq.s32.totalorder %s15, 0
      %p78 = por %p76, %p77
      %p79 = scmp.ne.s32.totalorder %s67, %s68
      %p80 = scmp.eq.s32.totalorder %s16, 1
      %p81 = por %p79, %p80
      %p83 = scmp.ne.s32.totalorder %s68, %s82
      %p84 = scmp.eq.s32.totalorder %s16, 0
      %p85 = por %p83, %p84
      %s87 = sadd.s32 %s86, 1
      %p90 = scmp.eq.s32.totalorder %s10, 1
      %p91 = scmp.ne.s32.totalorder %s86, %s88
      %p92 = scmp.eq.s32.totalorder %s10, 0
      %p93 = por %p91, %p92
      %p94 = scmp.ne.s32.totalorder %s86, %s88
      %p95 = scmp.eq.s32.totalorder %s15, 1
      %p96 = por %p94, %p95
      %p97 = scmp.ne.s32.totalorder %s88, %s89
      %p98 = scmp.eq.s32.totalorder %s15, 0
      %p99 = por %p97, %p98
      %p100 = scmp.ne.s32.totalorder %s88, %s89
      %p101 = scmp.eq.s32.totalorder %s16, 1
      %p102 = por %p100, %p101
      %p104 = scmp.ne.s32.totalorder %s89, %s103
      %p105 = scmp.eq.s32.totalorder %s16, 0
      %p106 = por %p104, %p105
      %s107 = ssub.s32 %s10, %s17
      %p108 = scmp.eq.s32.totalorder %s107, 0
      %s110 = sadd.s32 %s109, 1
      %s111 = scalar_select %p108, %s109, %s110
      %p114 = pneg %p108
      %p115 = scmp.eq.s32.totalorder %s10, 1
      %p116 = por %p114, %p115
      %p117 = scmp.ne.s32.totalorder %s109, %s112
      %p118 = scmp.eq.s32.totalorder %s10, 0
      %p119 = por %p117, %p118
      %p120 = scmp.ne.s32.totalorder %s109, %s112
      %p121 = scmp.eq.s32.totalorder %s15, 1
      %p122 = por %p120, %p121
      %p123 = scmp.ne.s32.totalorder %s112, %s113
      %p124 = scmp.eq.s32.totalorder %s15, 0
      %p125 = por %p123, %p124
      %p126 = scmp.ne.s32.totalorder %s112, %s113
      %p127 = scmp.eq.s32.totalorder %s16, 1
      %p128 = por %p126, %p127
      %p130 = scmp.ne.s32.totalorder %s113, %s129
      %p131 = scmp.eq.s32.totalorder %s16, 0
      %p132 = por %p130, %p131
      %p133 = scmp.le.s32.totalorder 1, %s10
      %p134 = scmp.lt.s32.totalorder %s10, 3
      %p135 = pnand %p133, %p134
      %p136 = pneg %p135
      // Predicated region
      $region9: #{tpu_custom_call.1} parent=5 // pred_check
        _
      $region10: #{tpu_custom_call.1} parent=5 // pred_check_branch
        %138 = sbr.rel (%p135) target = $region12
      $region11: #{tpu_custom_call.1} parent=5 // pred_region
        %s139 = ssub.s32 %s10, 1
        // Predicated region
        $region13: #{tpu_custom_call.1} parent=11 // pred_check
          %p140 = pneg %p57
        $region14: #{tpu_custom_call.1} parent=11 // pred_check_branch
          %142 = sbr.rel (%p140) target = $region16
        $region15: #{tpu_custom_call.1} parent=11 // pred_region
          _
        $region16: #{tpu_custom_call.1} parent=11 // pred_fallthru
          _
        // Predicated region
        $region17: #{tpu_custom_call.1} parent=11 // pred_check
          %p143 = pneg %p78
        $region18: #{tpu_custom_call.1} parent=11 // pred_check_branch
          %145 = sbr.rel (%p143) target = $region20
        $region19: #{tpu_custom_call.1} parent=11 // pred_region
          _
        $region20: #{tpu_custom_call.1} parent=11 // pred_fallthru
          _
        // Predicated region
        $region21: #{tpu_custom_call.1} parent=11 // pred_check
          %p146 = pneg %p99
        $region22: #{tpu_custom_call.1} parent=11 // pred_check_branch
          %148 = sbr.rel (%p146) target = $region24
        $region23: #{tpu_custom_call.1} parent=11 // pred_region
          _
        $region24: #{tpu_custom_call.1} parent=11 // pred_fallthru
          _
      $region12: #{tpu_custom_call.1} parent=5 // pred_fallthru
        _
      %p149 = scmp.lt.s32.totalorder %s10, 2
      // Predicated region
      $region25: #{tpu_custom_call.1} parent=5 // pred_check
        %p150 = pneg %p149
      $region26: #{tpu_custom_call.1} parent=5 // pred_check_branch
        %152 = sbr.rel (%p150) target = $region28
      $region27: #{tpu_custom_call.1} parent=5 // pred_region
        // Predicated region
        $region29: #{tpu_custom_call.1} parent=27 // pred_check
          %p153 = pneg %p30
        $region30: #{tpu_custom_call.1} parent=27 // pred_check_branch
          %155 = sbr.rel (%p153) target = $region32
        $region31: #{tpu_custom_call.1} parent=27 // pred_region
          %s156 = smul.u32 64, %s10
          %s157 = ssub.s32 100, %s156
          %p158 = scmp.lt.s32.totalorder %s157, 64
          %s159 = scalar_select %p158, %s157, 64
          %s160 = smul.u32 128, %s159
          %p161 = scmp.lt.s32.totalorder %s156, 99
          %s162 = scalar_select %p161, %s156, 99
          %s163 = smul.addr %s162, 8
          %s164 = scalar_lea.vmem %s0, %s163
          %s165 = smul.u32 64, %s10
          %s166 = ssub.s32 100, %s165
          %p167 = scmp.lt.s32.totalorder %s166, 64
          %s168 = scalar_select %p167, %s166, 64
          %s169 = smul.u32 128, %s168
        $region32: #{tpu_custom_call.1} parent=27 // pred_fallthru
          _
      $region28: #{tpu_custom_call.1} parent=5 // pred_fallthru
        _
      %p170 = scmp.le.s32.totalorder 1, %s10
      %p171 = scmp.lt.s32.totalorder %s10, 3
      %p172 = pnand %p170, %p171
      %p173 = pneg %p172
      // Predicated region
      $region33: #{tpu_custom_call.1} parent=5 // pred_check
        _
      $region34: #{tpu_custom_call.1} parent=5 // pred_check_branch
        %175 = sbr.rel (%p172) target = $region36
      $region35: #{tpu_custom_call.1} parent=5 // pred_region
        %s176 = ssub.s32 %s10, 1
        %s177 = smul.u32 64, %s15
        %s178 = ssub.s32 100, %s177
        %p179 = scmp.lt.s32.totalorder %s178, 64
        %s180 = scalar_select %p179, %s178, 64
        %s181 = smul.u32 128, %s180
        %p182 = scmp.lt.s32.totalorder %s177, 99
        %s183 = scalar_select %p182, %s177, 99
        %s184 = smul.addr %s183, 8
        %s185 = scalar_lea.vmem %s0, %s184
        %p186 = pneg %p36
        %p187 = pneg %p33
        %p188 = pneg %p57
        %p189 = pneg %p54
        %p190 = pneg %p78
        %p191 = pneg %p75
        %p192 = pneg %p99
        %p193 = pneg %p96
        %p194 = pneg %p125
        %p195 = pneg %p122
        %s196 = sand.u32 %s112, 1
        %s197 = sand.u32 %s112, 1
        %s198 = smul.addr %s197, 512
        %s199 = scalar_lea.vmem [#allocation2], %s198
        %s200 = smul.u32 64, %s15
        %s201 = ssub.s32 100, %s200
        %p202 = scmp.lt.s32.totalorder %s201, 64
        %s203 = scalar_select %p202, %s201, 64
        %s204 = smul.u32 128, %s203
        %p205 = scmp.lt.s32.totalorder %s200, 99
        %s206 = scalar_select %p205, %s200, 99
        %s207 = smul.addr %s206, 8
        %s208 = scalar_lea.vmem %s0, %s207
        %s209 = smul.u32 64, %s15
        %s210 = ssub.s32 100, %s209
        %p211 = scmp.lt.s32.totalorder %s210, 64
        %s212 = scalar_select %p211, %s210, 64
        %s213 = smul.u32 128, %s212
        %s214 = smul.u32 64, %s15
        %s215 = ssub.s32 100, %s214
        %p216 = scmp.lt.s32.totalorder %s215, 64
        %s217 = scalar_select %p216, %s215, 64
        %s218 = smul.u32 128, %s217
        %v219 = vld [vmem:[%s208] sm:$0xff]
        %v220 = vld [vmem:[%s208 + $0x8] sm:$0xff]
        %v221 = vld [vmem:[%s208 + $0x10] sm:$0xff]
        %v222 = vld [vmem:[%s208 + $0x18] sm:$0xff]
        %v223 = vld [vmem:[%s208 + $0x20] sm:$0xff]
        %v224 = vld [vmem:[%s208 + $0x28] sm:$0xff]
        %v225 = vld [vmem:[%s208 + $0x30] sm:$0xff]
        %v226 = vld [vmem:[%s208 + $0x38] sm:$0xff]
        %v227 = vld [vmem:[%s208 + $0x40] sm:$0xff]
        %v228 = vld [vmem:[%s208 + $0x48] sm:$0xff]
        %v229 = vld [vmem:[%s208 + $0x50] sm:$0xff]
        %v230 = vld [vmem:[%s208 + $0x58] sm:$0xff]
        %v231 = vld [vmem:[%s208 + $0x60] sm:$0xff]
        %v232 = vld [vmem:[%s208 + $0x68] sm:$0xff]
        %v233 = vld [vmem:[%s208 + $0x70] sm:$0xff]
        %v234 = vld [vmem:[%s208 + $0x78] sm:$0xff]
        %v235 = vld [vmem:[%s208 + $0x80] sm:$0xff]
        %v236 = vld [vmem:[%s208 + $0x88] sm:$0xff]
        %v237 = vld [vmem:[%s208 + $0x90] sm:$0xff]
        %v238 = vld [vmem:[%s208 + $0x98] sm:$0xff]
        %v239 = vld [vmem:[%s208 + $0xa0] sm:$0xff]
        %v240 = vld [vmem:[%s208 + $0xa8] sm:$0xff]
        %v241 = vld [vmem:[%s208 + $0xb0] sm:$0xff]
        %v242 = vld [vmem:[%s208 + $0xb8] sm:$0xff]
        %v243 = vld [vmem:[%s208 + $0xc0] sm:$0xff]
        %v244 = vld [vmem:[%s208 + $0xc8] sm:$0xff]
        %v245 = vld [vmem:[%s208 + $0xd0] sm:$0xff]
        %v246 = vld [vmem:[%s208 + $0xd8] sm:$0xff]
        %v247 = vld [vmem:[%s208 + $0xe0] sm:$0xff]
        %v248 = vld [vmem:[%s208 + $0xe8] sm:$0xff]
        %v249 = vld [vmem:[%s208 + $0xf0] sm:$0xff]
        %v250 = vld [vmem:[%s208 + $0xf8] sm:$0xff]
        %v251 = vld [vmem:[%s208 + $0x100] sm:$0xff]
        %v252 = vld [vmem:[%s208 + $0x108] sm:$0xff]
        %v253 = vld [vmem:[%s208 + $0x110] sm:$0xff]
        %v254 = vld [vmem:[%s208 + $0x118] sm:$0xff]
        %v255 = vld [vmem:[%s208 + $0x120] sm:$0xff]
        %v256 = vld [vmem:[%s208 + $0x128] sm:$0xff]
        %v257 = vld [vmem:[%s208 + $0x130] sm:$0xff]
        %v258 = vld [vmem:[%s208 + $0x138] sm:$0xff]
        %v259 = vld [vmem:[%s208 + $0x140] sm:$0xff]
        %v260 = vld [vmem:[%s208 + $0x148] sm:$0xff]
        %v261 = vld [vmem:[%s208 + $0x150] sm:$0xff]
        %v262 = vld [vmem:[%s208 + $0x158] sm:$0xff]
        %v263 = vld [vmem:[%s208 + $0x160] sm:$0xff]
        %v264 = vld [vmem:[%s208 + $0x168] sm:$0xff]
        %v265 = vld [vmem:[%s208 + $0x170] sm:$0xff]
        %v266 = vld [vmem:[%s208 + $0x178] sm:$0xff]
        %v267 = vld [vmem:[%s208 + $0x180] sm:$0xff]
        %v268 = vld [vmem:[%s208 + $0x188] sm:$0xff]
        %v269 = vld [vmem:[%s208 + $0x190] sm:$0xff]
        %v270 = vld [vmem:[%s208 + $0x198] sm:$0xff]
        %v271 = vld [vmem:[%s208 + $0x1a0] sm:$0xff]
        %v272 = vld [vmem:[%s208 + $0x1a8] sm:$0xff]
        %v273 = vld [vmem:[%s208 + $0x1b0] sm:$0xff]
        %v274 = vld [vmem:[%s208 + $0x1b8] sm:$0xff]
        %v275 = vld [vmem:[%s208 + $0x1c0] sm:$0xff]
        %v276 = vld [vmem:[%s208 + $0x1c8] sm:$0xff]
        %v277 = vld [vmem:[%s208 + $0x1d0] sm:$0xff]
        %v278 = vld [vmem:[%s208 + $0x1d8] sm:$0xff]
        %v279 = vld [vmem:[%s208 + $0x1e0] sm:$0xff]
        %v280 = vld [vmem:[%s208 + $0x1e8] sm:$0xff]
        %v281 = vld [vmem:[%s208 + $0x1f0] sm:$0xff]
        %v282 = vld [vmem:[%s208 + $0x1f8] sm:$0xff]
        %v283 = vld [vmem:[%s1] sm:$0x7]
        %vm284 = vcmask 23552
        %v286 = vsel %vm284, %v219, 0
        %v289 = vsel %vm284, %v220, 0
        %v292 = vsel %vm284, %v221, 0
        %v295 = vsel %vm284, %v222, 0
        %v298 = vsel %vm284, %v223, 0
        %v301 = vsel %vm284, %v224, 0
        %v304 = vsel %vm284, %v225, 0
        %v307 = vsel %vm284, %v226, 0
        %v310 = vsel %vm284, %v227, 0
        %v313 = vsel %vm284, %v228, 0
        %v316 = vsel %vm284, %v229, 0
        %v319 = vsel %vm284, %v230, 0
        %v322 = vsel %vm284, %v231, 0
        %v325 = vsel %vm284, %v232, 0
        %v328 = vsel %vm284, %v233, 0
        %v331 = vsel %vm284, %v234, 0
        %v334 = vsel %vm284, %v235, 0
        %v337 = vsel %vm284, %v236, 0
        %v340 = vsel %vm284, %v237, 0
        %v343 = vsel %vm284, %v238, 0
        %v346 = vsel %vm284, %v239, 0
        %v349 = vsel %vm284, %v240, 0
        %v352 = vsel %vm284, %v241, 0
        %v355 = vsel %vm284, %v242, 0
        %v358 = vsel %vm284, %v243, 0
        %v361 = vsel %vm284, %v244, 0
        %v364 = vsel %vm284, %v245, 0
        %v367 = vsel %vm284, %v246, 0
        %v370 = vsel %vm284, %v247, 0
        %v373 = vsel %vm284, %v248, 0
        %v376 = vsel %vm284, %v249, 0
        %v379 = vsel %vm284, %v250, 0
        %v382 = vsel %vm284, %v251, 0
        %v385 = vsel %vm284, %v252, 0
        %v388 = vsel %vm284, %v253, 0
        %v391 = vsel %vm284, %v254, 0
        %v394 = vsel %vm284, %v255, 0
        %v397 = vsel %vm284, %v256, 0
        %v400 = vsel %vm284, %v257, 0
        %v403 = vsel %vm284, %v258, 0
        %v406 = vsel %vm284, %v259, 0
        %v409 = vsel %vm284, %v260, 0
        %v412 = vsel %vm284, %v261, 0
        %v415 = vsel %vm284, %v262, 0
        %v418 = vsel %vm284, %v263, 0
        %v421 = vsel %vm284, %v264, 0
        %v424 = vsel %vm284, %v265, 0
        %v427 = vsel %vm284, %v266, 0
        %v430 = vsel %vm284, %v267, 0
        %v433 = vsel %vm284, %v268, 0
        %v436 = vsel %vm284, %v269, 0
        %v439 = vsel %vm284, %v270, 0
        %v442 = vsel %vm284, %v271, 0
        %v445 = vsel %vm284, %v272, 0
        %v448 = vsel %vm284, %v273, 0
        %v451 = vsel %vm284, %v274, 0
        %v454 = vsel %vm284, %v275, 0
        %v457 = vsel %vm284, %v276, 0
        %v460 = vsel %vm284, %v277, 0
        %v463 = vsel %vm284, %v278, 0
        %v466 = vsel %vm284, %v279, 0
        %v469 = vsel %vm284, %v280, 0
        %v472 = vsel %vm284, %v281, 0
        %v475 = vsel %vm284, %v282, 0
        %vm477 = vcmask 1042432
        %v479 = vsel %vm477, %v283, 0
        %481 = vmatprep.subr.mxu0 0.0
        %482 = vmatpush1.msra.mxu0 %v479
        %483 = vmatprep.subr.mxu0 0.0
        %484 = vmatpush1.msra.mxu0 0.0
        %485 = vmatprep.subr.mxu0 0.0
        %486 = vmatpush1.msra.mxu0 0.0
        %487 = vmatprep.subr.mxu0 0.0
        %488 = vmatpush1.msra.mxu0 0.0
        %489 = vmatprep.subr.mxu0 0.0
        %490 = vmatpush1.msra.mxu0 0.0
        %491 = vmatprep.subr.mxu0 0.0
        %492 = vmatpush1.msra.mxu0 0.0
        %493 = vmatprep.subr.mxu0 0.0
        %494 = vmatpush1.msra.mxu0 0.0
        %495 = vmatprep.subr.mxu0 0.0
        %496 = vmatpush1.msra.mxu0 0.0
        %497 = vmatprep.subr.mxu0 0.0
        %498 = vmatpush1.msra.mxu0 0.0
        %499 = vmatprep.subr.mxu0 0.0
        %500 = vmatpush1.msra.mxu0 0.0
        %501 = vmatprep.subr.mxu0 0.0
        %502 = vmatpush1.msra.mxu0 0.0
        %503 = vmatprep.subr.mxu0 0.0
        %504 = vmatpush1.msra.mxu0 0.0
        %505 = vmatprep.subr.mxu0 0.0
        %506 = vmatpush1.msra.mxu0 0.0
        %507 = vmatprep.subr.mxu0 0.0
        %508 = vmatpush1.msra.mxu0 0.0
        %509 = vmatprep.subr.mxu0 0.0
        %510 = vmatpush1.msra.mxu0 0.0
        %511 = vmatprep.subr.mxu0 0.0
        %512 = vmatpush1.msra.mxu0 0.0
        %513 = vmatprep.subr.mxu0 0.0
        %514 = vmatpush1.msra.mxu0 0.0
        %515 = vmatprep.subr.mxu0 0.0
        %516 = vmatpush1.msra.mxu0 0.0
        %517 = vmatprep.subr.mxu0 0.0
        %518 = vmatpush1.msra.mxu0 0.0
        %519 = vmatprep.subr.mxu0 0.0
        %520 = vmatpush1.msra.mxu0 0.0
        %521 = vmatprep.subr.mxu0 0.0
        %522 = vmatpush1.msra.mxu0 0.0
        %523 = vmatprep.subr.mxu0 0.0
        %524 = vmatpush1.msra.mxu0 0.0
        %525 = vmatprep.subr.mxu0 0.0
        %526 = vmatpush1.msra.mxu0 0.0
        %527 = vmatprep.subr.mxu0 0.0
        %528 = vmatpush1.msra.mxu0 0.0
        %529 = vmatprep.subr.mxu0 0.0
        %530 = vmatpush1.msra.mxu0 0.0
        %531 = vmatprep.subr.mxu0 0.0
        %532 = vmatpush1.msra.mxu0 0.0
        %533 = vmatprep.subr.mxu0 0.0
        %534 = vmatpush1.msra.mxu0 0.0
        %535 = vmatprep.subr.mxu0 0.0
        %536 = vmatpush1.msra.mxu0 0.0
        %537 = vmatprep.subr.mxu0 0.0
        %538 = vmatpush1.msra.mxu0 0.0
        %539 = vmatprep.subr.mxu0 0.0
        %540 = vmatpush1.msra.mxu0 0.0
        %541 = vmatprep.subr.mxu0 0.0
        %542 = vmatpush1.msra.mxu0 0.0
        %543 = vmatprep.subr.mxu0 0.0
        %544 = vmatpush1.msra.mxu0 0.0
        %545 = vmatprep.mubr.f32.mxu0 0.0
        %546 = vmatmul.mubr.f32.gmra.mrb[0].mxu0 %v286
        %v547 = vpop.f32.mrb[0].mxu0
        %v548 = vadd.f32 0.0, %v547
        %v549 = vpop.f32.mrb[0].mxu0
        %550 = vmatprep.mubr.f32.mxu0 0.0
        %551 = vmatmul.mubr.f32.gmra.mrb[0].mxu0 %v289
        %v552 = vpop.f32.mrb[0].mxu0
        %v553 = vadd.f32 0.0, %v552
        %v554 = vpop.f32.mrb[0].mxu0
        %555 = vmatprep.mubr.f32.mxu0 0.0
        %556 = vmatmul.mubr.f32.gmra.mrb[0].mxu0 %v292
        %v557 = vpop.f32.mrb[0].mxu0
        %v558 = vadd.f32 0.0, %v557
        %v559 = vpop.f32.mrb[0].mxu0
        %560 = vmatprep.mubr.f32.mxu0 0.0
        %561 = vmatmul.mubr.f32.gmra.mrb[0].mxu0 %v295
        %v562 = vpop.f32.mrb[0].mxu0
        %v563 = vadd.f32 0.0, %v562
        %v564 = vpop.f32.mrb[0].mxu0
        %565 = vmatprep.mubr.f32.mxu0 0.0
        %566 = vmatmul.mubr.f32.gmra.mrb[0].mxu0 %v298
        %v567 = vpop.f32.mrb[0].mxu0
        %v568 = vadd.f32 0.0, %v567
        %v569 = vpop.f32.mrb[0].mxu0
        %570 = vmatprep.mubr.f32.mxu0 0.0
        %571 = vmatmul.mubr.f32.gmra.mrb[0].mxu0 %v301
        %v572 = vpop.f32.mrb[0].mxu0
        %v573 = vadd.f32 0.0, %v572
        %v574 = vpop.f32.mrb[0].mxu0
        %575 = vmatprep.mubr.f32.mxu0 0.0
        %576 = vmatmul.mubr.f32.gmra.mrb[0].mxu0 %v304
        %v577 = vpop.f32.mrb[0].mxu0
        %v578 = vadd.f32 0.0, %v577
        %v579 = vpop.f32.mrb[0].mxu0
        %580 = vmatprep.mubr.f32.mxu0 0.0
        %581 = vmatmul.mubr.f32.gmra.mrb[0].mxu0 %v307
        %v582 = vpop.f32.mrb[0].mxu0
        %v583 = vadd.f32 0.0, %v582
        %v584 = vpop.f32.mrb[0].mxu0
        %585 = vmatprep.mubr.f32.mxu0 0.0
        %586 = vmatmul.mubr.f32.gmra.mrb[0].mxu0 %v310
        %v587 = vpop.f32.mrb[0].mxu0
        %v588 = vadd.f32 0.0, %v587
        %v589 = vpop.f32.mrb[0].mxu0
        %590 = vmatprep.mubr.f32.mxu0 0.0
        %591 = vmatmul.mubr.f32.gmra.mrb[0].mxu0 %v313
        %v592 = vpop.f32.mrb[0].mxu0
        %v593 = vadd.f32 0.0, %v592
        %v594 = vpop.f32.mrb[0].mxu0
        %595 = vmatprep.mubr.f32.mxu0 0.0
        %596 = vmatmul.mubr.f32.gmra.mrb[0].mxu0 %v316
        %v597 = vpop.f32.mrb[0].mxu0
        %v598 = vadd.f32 0.0, %v597
        %v599 = vpop.f32.mrb[0].mxu0
        %600 = vmatprep.mubr.f32.mxu0 0.0
        %601 = vmatmul.mubr.f32.gmra.mrb[0].mxu0 %v319
        %v602 = vpop.f32.mrb[0].mxu0
        %v603 = vadd.f32 0.0, %v602
        %v604 = vpop.f32.mrb[0].mxu0
        %605 = vmatprep.mubr.f32.mxu0 0.0
        %606 = vmatmul.mubr.f32.gmra.mrb[0].mxu0 %v322
        %v607 = vpop.f32.mrb[0].mxu0
        %v608 = vadd.f32 0.0, %v607
        %v609 = vpop.f32.mrb[0].mxu0
        %610 = vmatprep.mubr.f32.mxu0 0.0
        %611 = vmatmul.mubr.f32.gmra.mrb[0].mxu0 %v325
        %v612 = vpop.f32.mrb[0].mxu0
        %v613 = vadd.f32 0.0, %v612
        %v614 = vpop.f32.mrb[0].mxu0
        %615 = vmatprep.mubr.f32.mxu0 0.0
        %616 = vmatmul.mubr.f32.gmra.mrb[0].mxu0 %v328
        %v617 = vpop.f32.mrb[0].mxu0
        %v618 = vadd.f32 0.0, %v617
        %v619 = vpop.f32.mrb[0].mxu0
        %620 = vmatprep.mubr.f32.mxu0 0.0
        %621 = vmatmul.mubr.f32.gmra.mrb[0].mxu0 %v331
        %v622 = vpop.f32.mrb[0].mxu0
        %v623 = vadd.f32 0.0, %v622
        %v624 = vpop.f32.mrb[0].mxu0
        %625 = vmatprep.mubr.f32.mxu0 0.0
        %626 = vmatmul.mubr.f32.gmra.mrb[0].mxu0 %v334
        %v627 = vpop.f32.mrb[0].mxu0
        %v628 = vadd.f32 0.0, %v627
        %v629 = vpop.f32.mrb[0].mxu0
        %630 = vmatprep.mubr.f32.mxu0 0.0
        %631 = vmatmul.mubr.f32.gmra.mrb[0].mxu0 %v337
        %v632 = vpop.f32.mrb[0].mxu0
        %v633 = vadd.f32 0.0, %v632
        %v634 = vpop.f32.mrb[0].mxu0
        %635 = vmatprep.mubr.f32.mxu0 0.0
        %636 = vmatmul.mubr.f32.gmra.mrb[0].mxu0 %v340
        %v637 = vpop.f32.mrb[0].mxu0
        %v638 = vadd.f32 0.0, %v637
        %v639 = vpop.f32.mrb[0].mxu0
        %640 = vmatprep.mubr.f32.mxu0 0.0
        %641 = vmatmul.mubr.f32.gmra.mrb[0].mxu0 %v343
        %v642 = vpop.f32.mrb[0].mxu0
        %v643 = vadd.f32 0.0, %v642
        %v644 = vpop.f32.mrb[0].mxu0
        %645 = vmatprep.mubr.f32.mxu0 0.0
        %646 = vmatmul.mubr.f32.gmra.mrb[0].mxu0 %v346
        %v647 = vpop.f32.mrb[0].mxu0
        %v648 = vadd.f32 0.0, %v647
        %v649 = vpop.f32.mrb[0].mxu0
        %650 = vmatprep.mubr.f32.mxu0 0.0
        %651 = vmatmul.mubr.f32.gmra.mrb[0].mxu0 %v349
        %v652 = vpop.f32.mrb[0].mxu0
        %v653 = vadd.f32 0.0, %v652
        %v654 = vpop.f32.mrb[0].mxu0
        %655 = vmatprep.mubr.f32.mxu0 0.0
        %656 = vmatmul.mubr.f32.gmra.mrb[0].mxu0 %v352
        %v657 = vpop.f32.mrb[0].mxu0
        %v658 = vadd.f32 0.0, %v657
        %v659 = vpop.f32.mrb[0].mxu0
        %660 = vmatprep.mubr.f32.mxu0 0.0
        %661 = vmatmul.mubr.f32.gmra.mrb[0].mxu0 %v355
        %v662 = vpop.f32.mrb[0].mxu0
        %v663 = vadd.f32 0.0, %v662
        %v664 = vpop.f32.mrb[0].mxu0
        %665 = vmatprep.mubr.f32.mxu0 0.0
        %666 = vmatmul.mubr.f32.gmra.mrb[0].mxu0 %v358
        %v667 = vpop.f32.mrb[0].mxu0
        %v668 = vadd.f32 0.0, %v667
        %v669 = vpop.f32.mrb[0].mxu0
        %670 = vmatprep.mubr.f32.mxu0 0.0
        %671 = vmatmul.mubr.f32.gmra.mrb[0].mxu0 %v361
        %v672 = vpop.f32.mrb[0].mxu0
        %v673 = vadd.f32 0.0, %v672
        %v674 = vpop.f32.mrb[0].mxu0
        %675 = vmatprep.mubr.f32.mxu0 0.0
        %676 = vmatmul.mubr.f32.gmra.mrb[0].mxu0 %v364
        %v677 = vpop.f32.mrb[0].mxu0
        %v678 = vadd.f32 0.0, %v677
        %v679 = vpop.f32.mrb[0].mxu0
        %680 = vmatprep.mubr.f32.mxu0 0.0
        %681 = vmatmul.mubr.f32.gmra.mrb[0].mxu0 %v367
        %v682 = vpop.f32.mrb[0].mxu0
        %v683 = vadd.f32 0.0, %v682
        %v684 = vpop.f32.mrb[0].mxu0
        %685 = vmatprep.mubr.f32.mxu0 0.0
        %686 = vmatmul.mubr.f32.gmra.mrb[0].mxu0 %v370
        %v687 = vpop.f32.mrb[0].mxu0
        %v688 = vadd.f32 0.0, %v687
        %v689 = vpop.f32.mrb[0].mxu0
        %690 = vmatprep.mubr.f32.mxu0 0.0
        %691 = vmatmul.mubr.f32.gmra.mrb[0].mxu0 %v373
        %v692 = vpop.f32.mrb[0].mxu0
        %v693 = vadd.f32 0.0, %v692
        %v694 = vpop.f32.mrb[0].mxu0
        %695 = vmatprep.mubr.f32.mxu0 0.0
        %696 = vmatmul.mubr.f32.gmra.mrb[0].mxu0 %v376
        %v697 = vpop.f32.mrb[0].mxu0
        %v698 = vadd.f32 0.0, %v697
        %v699 = vpop.f32.mrb[0].mxu0
        %700 = vmatprep.mubr.f32.mxu0 0.0
        %701 = vmatmul.mubr.f32.gmra.mrb[0].mxu0 %v379
        %v702 = vpop.f32.mrb[0].mxu0
        %v703 = vadd.f32 0.0, %v702
        %v704 = vpop.f32.mrb[0].mxu0
        %705 = vmatprep.mubr.f32.mxu0 0.0
        %706 = vmatmul.mubr.f32.gmra.mrb[0].mxu0 %v382
        %v707 = vpop.f32.mrb[0].mxu0
        %v708 = vadd.f32 0.0, %v707
        %v709 = vpop.f32.mrb[0].mxu0
        %710 = vmatprep.mubr.f32.mxu0 0.0
        %711 = vmatmul.mubr.f32.gmra.mrb[0].mxu0 %v385
        %v712 = vpop.f32.mrb[0].mxu0
        %v713 = vadd.f32 0.0, %v712
        %v714 = vpop.f32.mrb[0].mxu0
        %715 = vmatprep.mubr.f32.mxu0 0.0
        %716 = vmatmul.mubr.f32.gmra.mrb[0].mxu0 %v388
        %v717 = vpop.f32.mrb[0].mxu0
        %v718 = vadd.f32 0.0, %v717
        %v719 = vpop.f32.mrb[0].mxu0
        %720 = vmatprep.mubr.f32.mxu0 0.0
        %721 = vmatmul.mubr.f32.gmra.mrb[0].mxu0 %v391
        %v722 = vpop.f32.mrb[0].mxu0
        %v723 = vadd.f32 0.0, %v722
        %v724 = vpop.f32.mrb[0].mxu0
        %725 = vmatprep.mubr.f32.mxu0 0.0
        %726 = vmatmul.mubr.f32.gmra.mrb[0].mxu0 %v394
        %v727 = vpop.f32.mrb[0].mxu0
        %v728 = vadd.f32 0.0, %v727
        %v729 = vpop.f32.mrb[0].mxu0
        %730 = vmatprep.mubr.f32.mxu0 0.0
        %731 = vmatmul.mubr.f32.gmra.mrb[0].mxu0 %v397
        %v732 = vpop.f32.mrb[0].mxu0
        %v733 = vadd.f32 0.0, %v732
        %v734 = vpop.f32.mrb[0].mxu0
        %735 = vmatprep.mubr.f32.mxu0 0.0
        %736 = vmatmul.mubr.f32.gmra.mrb[0].mxu0 %v400
        %v737 = vpop.f32.mrb[0].mxu0
        %v738 = vadd.f32 0.0, %v737
        %v739 = vpop.f32.mrb[0].mxu0
        %740 = vmatprep.mubr.f32.mxu0 0.0
        %741 = vmatmul.mubr.f32.gmra.mrb[0].mxu0 %v403
        %v742 = vpop.f32.mrb[0].mxu0
        %v743 = vadd.f32 0.0, %v742
        %v744 = vpop.f32.mrb[0].mxu0
        %745 = vmatprep.mubr.f32.mxu0 0.0
        %746 = vmatmul.mubr.f32.gmra.mrb[0].mxu0 %v406
        %v747 = vpop.f32.mrb[0].mxu0
        %v748 = vadd.f32 0.0, %v747
        %v749 = vpop.f32.mrb[0].mxu0
        %750 = vmatprep.mubr.f32.mxu0 0.0
        %751 = vmatmul.mubr.f32.gmra.mrb[0].mxu0 %v409
        %v752 = vpop.f32.mrb[0].mxu0
        %v753 = vadd.f32 0.0, %v752
        %v754 = vpop.f32.mrb[0].mxu0
        %755 = vmatprep.mubr.f32.mxu0 0.0
        %756 = vmatmul.mubr.f32.gmra.mrb[0].mxu0 %v412
        %v757 = vpop.f32.mrb[0].mxu0
        %v758 = vadd.f32 0.0, %v757
        %v759 = vpop.f32.mrb[0].mxu0
        %760 = vmatprep.mubr.f32.mxu0 0.0
        %761 = vmatmul.mubr.f32.gmra.mrb[0].mxu0 %v415
        %v762 = vpop.f32.mrb[0].mxu0
        %v763 = vadd.f32 0.0, %v762
        %v764 = vpop.f32.mrb[0].mxu0
        %765 = vmatprep.mubr.f32.mxu0 0.0
        %766 = vmatmul.mubr.f32.gmra.mrb[0].mxu0 %v418
        %v767 = vpop.f32.mrb[0].mxu0
        %v768 = vadd.f32 0.0, %v767
        %v769 = vpop.f32.mrb[0].mxu0
        %770 = vmatprep.mubr.f32.mxu0 0.0
        %771 = vmatmul.mubr.f32.gmra.mrb[0].mxu0 %v421
        %v772 = vpop.f32.mrb[0].mxu0
        %v773 = vadd.f32 0.0, %v772
        %v774 = vpop.f32.mrb[0].mxu0
        %775 = vmatprep.mubr.f32.mxu0 0.0
        %776 = vmatmul.mubr.f32.gmra.mrb[0].mxu0 %v424
        %v777 = vpop.f32.mrb[0].mxu0
        %v778 = vadd.f32 0.0, %v777
        %v779 = vpop.f32.mrb[0].mxu0
        %780 = vmatprep.mubr.f32.mxu0 0.0
        %781 = vmatmul.mubr.f32.gmra.mrb[0].mxu0 %v427
        %v782 = vpop.f32.mrb[0].mxu0
        %v783 = vadd.f32 0.0, %v782
        %v784 = vpop.f32.mrb[0].mxu0
        %785 = vmatprep.mubr.f32.mxu0 0.0
        %786 = vmatmul.mubr.f32.gmra.mrb[0].mxu0 %v430
        %v787 = vpop.f32.mrb[0].mxu0
        %v788 = vadd.f32 0.0, %v787
        %v789 = vpop.f32.mrb[0].mxu0
        %790 = vmatprep.mubr.f32.mxu0 0.0
        %791 = vmatmul.mubr.f32.gmra.mrb[0].mxu0 %v433
        %v792 = vpop.f32.mrb[0].mxu0
        %v793 = vadd.f32 0.0, %v792
        %v794 = vpop.f32.mrb[0].mxu0
        %795 = vmatprep.mubr.f32.mxu0 0.0
        %796 = vmatmul.mubr.f32.gmra.mrb[0].mxu0 %v436
        %v797 = vpop.f32.mrb[0].mxu0
        %v798 = vadd.f32 0.0, %v797
        %v799 = vpop.f32.mrb[0].mxu0
        %800 = vmatprep.mubr.f32.mxu0 0.0
        %801 = vmatmul.mubr.f32.gmra.mrb[0].mxu0 %v439
        %v802 = vpop.f32.mrb[0].mxu0
        %v803 = vadd.f32 0.0, %v802
        %v804 = vpop.f32.mrb[0].mxu0
        %805 = vmatprep.mubr.f32.mxu0 0.0
        %806 = vmatmul.mubr.f32.gmra.mrb[0].mxu0 %v442
        %v807 = vpop.f32.mrb[0].mxu0
        %v808 = vadd.f32 0.0, %v807
        %v809 = vpop.f32.mrb[0].mxu0
        %810 = vmatprep.mubr.f32.mxu0 0.0
        %811 = vmatmul.mubr.f32.gmra.mrb[0].mxu0 %v445
        %v812 = vpop.f32.mrb[0].mxu0
        %v813 = vadd.f32 0.0, %v812
        %v814 = vpop.f32.mrb[0].mxu0
        %815 = vmatprep.mubr.f32.mxu0 0.0
        %816 = vmatmul.mubr.f32.gmra.mrb[0].mxu0 %v448
        %v817 = vpop.f32.mrb[0].mxu0
        %v818 = vadd.f32 0.0, %v817
        %v819 = vpop.f32.mrb[0].mxu0
        %820 = vmatprep.mubr.f32.mxu0 0.0
        %821 = vmatmul.mubr.f32.gmra.mrb[0].mxu0 %v451
        %v822 = vpop.f32.mrb[0].mxu0
        %v823 = vadd.f32 0.0, %v822
        %v824 = vpop.f32.mrb[0].mxu0
        %825 = vmatprep.mubr.f32.mxu0 0.0
        %826 = vmatmul.mubr.f32.gmra.mrb[0].mxu0 %v454
        %v827 = vpop.f32.mrb[0].mxu0
        %v828 = vadd.f32 0.0, %v827
        %v829 = vpop.f32.mrb[0].mxu0
        %830 = vmatprep.mubr.f32.mxu0 0.0
        %831 = vmatmul.mubr.f32.gmra.mrb[0].mxu0 %v457
        %v832 = vpop.f32.mrb[0].mxu0
        %v833 = vadd.f32 0.0, %v832
        %v834 = vpop.f32.mrb[0].mxu0
        %835 = vmatprep.mubr.f32.mxu0 0.0
        %836 = vmatmul.mubr.f32.gmra.mrb[0].mxu0 %v460
        %v837 = vpop.f32.mrb[0].mxu0
        %v838 = vadd.f32 0.0, %v837
        %v839 = vpop.f32.mrb[0].mxu0
        %840 = vmatprep.mubr.f32.mxu0 0.0
        %841 = vmatmul.mubr.f32.gmra.mrb[0].mxu0 %v463
        %v842 = vpop.f32.mrb[0].mxu0
        %v843 = vadd.f32 0.0, %v842
        %v844 = vpop.f32.mrb[0].mxu0
        %845 = vmatprep.mubr.f32.mxu0 0.0
        %846 = vmatmul.mubr.f32.gmra.mrb[0].mxu0 %v466
        %v847 = vpop.f32.mrb[0].mxu0
        %v848 = vadd.f32 0.0, %v847
        %v849 = vpop.f32.mrb[0].mxu0
        %850 = vmatprep.mubr.f32.mxu0 0.0
        %851 = vmatmul.mubr.f32.gmra.mrb[0].mxu0 %v469
        %v852 = vpop.f32.mrb[0].mxu0
        %v853 = vadd.f32 0.0, %v852
        %v854 = vpop.f32.mrb[0].mxu0
        %855 = vmatprep.mubr.f32.mxu0 0.0
        %856 = vmatmul.mubr.f32.gmra.mrb[0].mxu0 %v472
        %v857 = vpop.f32.mrb[0].mxu0
        %v858 = vadd.f32 0.0, %v857
        %v859 = vpop.f32.mrb[0].mxu0
        %860 = vmatprep.mubr.f32.mxu0 0.0
        %861 = vmatmul.mubr.f32.gmra.mrb[0].mxu0 %v475
        %v862 = vpop.f32.mrb[0].mxu0
        %v863 = vadd.f32 0.0, %v862
        %v864 = vpop.f32.mrb[0].mxu0
        %865 = vdwg.mxu0
        %v866 = vld [vmem:[%s2] sm:$0x1]
        %v868 = vlaneseq
        %v869 = vshrl.u32 %v868, 7
        %v870 = vsub.s32 0, %v869
        %v871 = vrot.slane %v866, %v870
        %v873 = vmul.f32 %v548, %v871
        %v874 = vmul.f32 %v553, %v871
        %v875 = vmul.f32 %v558, %v871
        %v876 = vmul.f32 %v563, %v871
        %v877 = vmul.f32 %v568, %v871
        %v878 = vmul.f32 %v573, %v871
        %v879 = vmul.f32 %v578, %v871
        %v880 = vmul.f32 %v583, %v871
        %v881 = vmul.f32 %v588, %v871
        %v882 = vmul.f32 %v593, %v871
        %v883 = vmul.f32 %v598, %v871
        %v884 = vmul.f32 %v603, %v871
        %v885 = vmul.f32 %v608, %v871
        %v886 = vmul.f32 %v613, %v871
        %v887 = vmul.f32 %v618, %v871
        %v888 = vmul.f32 %v623, %v871
        %v889 = vmul.f32 %v628, %v871
        %v890 = vmul.f32 %v633, %v871
        %v891 = vmul.f32 %v638, %v871
        %v892 = vmul.f32 %v643, %v871
        %v893 = vmul.f32 %v648, %v871
        %v894 = vmul.f32 %v653, %v871
        %v895 = vmul.f32 %v658, %v871
        %v896 = vmul.f32 %v663, %v871
        %v897 = vmul.f32 %v668, %v871
        %v898 = vmul.f32 %v673, %v871
        %v899 = vmul.f32 %v678, %v871
        %v900 = vmul.f32 %v683, %v871
        %v901 = vmul.f32 %v688, %v871
        %v902 = vmul.f32 %v693, %v871
        %v903 = vmul.f32 %v698, %v871
        %v904 = vmul.f32 %v703, %v871
        %v905 = vmul.f32 %v708, %v871
        %v906 = vmul.f32 %v713, %v871
        %v907 = vmul.f32 %v718, %v871
        %v908 = vmul.f32 %v723, %v871
        %v909 = vmul.f32 %v728, %v871
        %v910 = vmul.f32 %v733, %v871
        %v911 = vmul.f32 %v738, %v871
        %v912 = vmul.f32 %v743, %v871
        %v913 = vmul.f32 %v748, %v871
        %v914 = vmul.f32 %v753, %v871
        %v915 = vmul.f32 %v758, %v871
        %v916 = vmul.f32 %v763, %v871
        %v917 = vmul.f32 %v768, %v871
        %v918 = vmul.f32 %v773, %v871
        %v919 = vmul.f32 %v778, %v871
        %v920 = vmul.f32 %v783, %v871
        %v921 = vmul.f32 %v788, %v871
        %v922 = vmul.f32 %v793, %v871
        %v923 = vmul.f32 %v798, %v871
        %v924 = vmul.f32 %v803, %v871
        %v925 = vmul.f32 %v808, %v871
        %v926 = vmul.f32 %v813, %v871
        %v927 = vmul.f32 %v818, %v871
        %v928 = vmul.f32 %v823, %v871
        %v929 = vmul.f32 %v828, %v871
        %v930 = vmul.f32 %v833, %v871
        %v931 = vmul.f32 %v838, %v871
        %v932 = vmul.f32 %v843, %v871
        %v933 = vmul.f32 %v848, %v871
        %v934 = vmul.f32 %v853, %v871
        %v935 = vmul.f32 %v858, %v871
        %v936 = vmul.f32 %v863, %v871
        %v937 = vld [vmem:[%s3] sm:$0x1]
        %v939 = vlaneseq
        %v940 = vshrl.u32 %v939, 7
        %v941 = vsub.s32 0, %v940
        %v942 = vrot.slane %v937, %v941
        %v944 = vadd.f32 %v873, %v942
        %v945 = vadd.f32 %v874, %v942
        %v946 = vadd.f32 %v875, %v942
        %v947 = vadd.f32 %v876, %v942
        %v948 = vadd.f32 %v877, %v942
        %v949 = vadd.f32 %v878, %v942
        %v950 = vadd.f32 %v879, %v942
        %v951 = vadd.f32 %v880, %v942
        %v952 = vadd.f32 %v881, %v942
        %v953 = vadd.f32 %v882, %v942
        %v954 = vadd.f32 %v883, %v942
        %v955 = vadd.f32 %v884, %v942
        %v956 = vadd.f32 %v885, %v942
        %v957 = vadd.f32 %v886, %v942
        %v958 = vadd.f32 %v887, %v942
        %v959 = vadd.f32 %v888, %v942
        %v960 = vadd.f32 %v889, %v942
        %v961 = vadd.f32 %v890, %v942
        %v962 = vadd.f32 %v891, %v942
        %v963 = vadd.f32 %v892, %v942
        %v964 = vadd.f32 %v893, %v942
        %v965 = vadd.f32 %v894, %v942
        %v966 = vadd.f32 %v895, %v942
        %v967 = vadd.f32 %v896, %v942
        %v968 = vadd.f32 %v897, %v942
        %v969 = vadd.f32 %v898, %v942
        %v970 = vadd.f32 %v899, %v942
        %v971 = vadd.f32 %v900, %v942
        %v972 = vadd.f32 %v901, %v942
        %v973 = vadd.f32 %v902, %v942
        %v974 = vadd.f32 %v903, %v942
        %v975 = vadd.f32 %v904, %v942
        %v976 = vadd.f32 %v905, %v942
        %v977 = vadd.f32 %v906, %v942
        %v978 = vadd.f32 %v907, %v942
        %v979 = vadd.f32 %v908, %v942
        %v980 = vadd.f32 %v909, %v942
        %v981 = vadd.f32 %v910, %v942
        %v982 = vadd.f32 %v911, %v942
        %v983 = vadd.f32 %v912, %v942
        %v984 = vadd.f32 %v913, %v942
        %v985 = vadd.f32 %v914, %v942
        %v986 = vadd.f32 %v915, %v942
        %v987 = vadd.f32 %v916, %v942
        %v988 = vadd.f32 %v917, %v942
        %v989 = vadd.f32 %v918, %v942
        %v990 = vadd.f32 %v919, %v942
        %v991 = vadd.f32 %v920, %v942
        %v992 = vadd.f32 %v921, %v942
        %v993 = vadd.f32 %v922, %v942
        %v994 = vadd.f32 %v923, %v942
        %v995 = vadd.f32 %v924, %v942
        %v996 = vadd.f32 %v925, %v942
        %v997 = vadd.f32 %v926, %v942
        %v998 = vadd.f32 %v927, %v942
        %v999 = vadd.f32 %v928, %v942
        %v1000 = vadd.f32 %v929, %v942
        %v1001 = vadd.f32 %v930, %v942
        %v1002 = vadd.f32 %v931, %v942
        %v1003 = vadd.f32 %v932, %v942
        %v1004 = vadd.f32 %v933, %v942
        %v1005 = vadd.f32 %v934, %v942
        %v1006 = vadd.f32 %v935, %v942
        %v1007 = vadd.f32 %v936, %v942
        %vm1008 = vcmask 195584
        %1009 = vst.msk [vmem:[%s199] sm:$0xff] %vm1008, %v944
        %1010 = vst.msk [vmem:[%s199 + $0x8] sm:$0xff] %vm1008, %v945
        %1011 = vst.msk [vmem:[%s199 + $0x10] sm:$0xff] %vm1008, %v946
        %1012 = vst.msk [vmem:[%s199 + $0x18] sm:$0xff] %vm1008, %v947
        %1013 = vst.msk [vmem:[%s199 + $0x20] sm:$0xff] %vm1008, %v948
        %1014 = vst.msk [vmem:[%s199 + $0x28] sm:$0xff] %vm1008, %v949
        %1015 = vst.msk [vmem:[%s199 + $0x30] sm:$0xff] %vm1008, %v950
        %1016 = vst.msk [vmem:[%s199 + $0x38] sm:$0xff] %vm1008, %v951
        %1017 = vst.msk [vmem:[%s199 + $0x40] sm:$0xff] %vm1008, %v952
        %1018 = vst.msk [vmem:[%s199 + $0x48] sm:$0xff] %vm1008, %v953
        %1019 = vst.msk [vmem:[%s199 + $0x50] sm:$0xff] %vm1008, %v954
        %1020 = vst.msk [vmem:[%s199 + $0x58] sm:$0xff] %vm1008, %v955
        %1021 = vst.msk [vmem:[%s199 + $0x60] sm:$0xff] %vm1008, %v956
        %1022 = vst.msk [vmem:[%s199 + $0x68] sm:$0xff] %vm1008, %v957
        %1023 = vst.msk [vmem:[%s199 + $0x70] sm:$0xff] %vm1008, %v958
        %1024 = vst.msk [vmem:[%s199 + $0x78] sm:$0xff] %vm1008, %v959
        %1025 = vst.msk [vmem:[%s199 + $0x80] sm:$0xff] %vm1008, %v960
        %1026 = vst.msk [vmem:[%s199 + $0x88] sm:$0xff] %vm1008, %v961
        %1027 = vst.msk [vmem:[%s199 + $0x90] sm:$0xff] %vm1008, %v962
        %1028 = vst.msk [vmem:[%s199 + $0x98] sm:$0xff] %vm1008, %v963
        %1029 = vst.msk [vmem:[%s199 + $0xa0] sm:$0xff] %vm1008, %v964
        %1030 = vst.msk [vmem:[%s199 + $0xa8] sm:$0xff] %vm1008, %v965
        %1031 = vst.msk [vmem:[%s199 + $0xb0] sm:$0xff] %vm1008, %v966
        %1032 = vst.msk [vmem:[%s199 + $0xb8] sm:$0xff] %vm1008, %v967
        %1033 = vst.msk [vmem:[%s199 + $0xc0] sm:$0xff] %vm1008, %v968
        %1034 = vst.msk [vmem:[%s199 + $0xc8] sm:$0xff] %vm1008, %v969
        %1035 = vst.msk [vmem:[%s199 + $0xd0] sm:$0xff] %vm1008, %v970
        %1036 = vst.msk [vmem:[%s199 + $0xd8] sm:$0xff] %vm1008, %v971
        %1037 = vst.msk [vmem:[%s199 + $0xe0] sm:$0xff] %vm1008, %v972
        %1038 = vst.msk [vmem:[%s199 + $0xe8] sm:$0xff] %vm1008, %v973
        %1039 = vst.msk [vmem:[%s199 + $0xf0] sm:$0xff] %vm1008, %v974
        %1040 = vst.msk [vmem:[%s199 + $0xf8] sm:$0xff] %vm1008, %v975
        %1041 = vst.msk [vmem:[%s199 + $0x100] sm:$0xff] %vm1008, %v976
        %1042 = vst.msk [vmem:[%s199 + $0x108] sm:$0xff] %vm1008, %v977
        %1043 = vst.msk [vmem:[%s199 + $0x110] sm:$0xff] %vm1008, %v978
        %1044 = vst.msk [vmem:[%s199 + $0x118] sm:$0xff] %vm1008, %v979
        %1045 = vst.msk [vmem:[%s199 + $0x120] sm:$0xff] %vm1008, %v980
        %1046 = vst.msk [vmem:[%s199 + $0x128] sm:$0xff] %vm1008, %v981
        %1047 = vst.msk [vmem:[%s199 + $0x130] sm:$0xff] %vm1008, %v982
        %1048 = vst.msk [vmem:[%s199 + $0x138] sm:$0xff] %vm1008, %v983
        %1049 = vst.msk [vmem:[%s199 + $0x140] sm:$0xff] %vm1008, %v984
        %1050 = vst.msk [vmem:[%s199 + $0x148] sm:$0xff] %vm1008, %v985
        %1051 = vst.msk [vmem:[%s199 + $0x150] sm:$0xff] %vm1008, %v986
        %1052 = vst.msk [vmem:[%s199 + $0x158] sm:$0xff] %vm1008, %v987
        %1053 = vst.msk [vmem:[%s199 + $0x160] sm:$0xff] %vm1008, %v988
        %1054 = vst.msk [vmem:[%s199 + $0x168] sm:$0xff] %vm1008, %v989
        %1055 = vst.msk [vmem:[%s199 + $0x170] sm:$0xff] %vm1008, %v990
        %1056 = vst.msk [vmem:[%s199 + $0x178] sm:$0xff] %vm1008, %v991
        %1057 = vst.msk [vmem:[%s199 + $0x180] sm:$0xff] %vm1008, %v992
        %1058 = vst.msk [vmem:[%s199 + $0x188] sm:$0xff] %vm1008, %v993
        %1059 = vst.msk [vmem:[%s199 + $0x190] sm:$0xff] %vm1008, %v994
        %1060 = vst.msk [vmem:[%s199 + $0x198] sm:$0xff] %vm1008, %v995
        %1061 = vst.msk [vmem:[%s199 + $0x1a0] sm:$0xff] %vm1008, %v996
        %1062 = vst.msk [vmem:[%s199 + $0x1a8] sm:$0xff] %vm1008, %v997
        %1063 = vst.msk [vmem:[%s199 + $0x1b0] sm:$0xff] %vm1008, %v998
        %1064 = vst.msk [vmem:[%s199 + $0x1b8] sm:$0xff] %vm1008, %v999
        %1065 = vst.msk [vmem:[%s199 + $0x1c0] sm:$0xff] %vm1008, %v1000
        %1066 = vst.msk [vmem:[%s199 + $0x1c8] sm:$0xff] %vm1008, %v1001
        %1067 = vst.msk [vmem:[%s199 + $0x1d0] sm:$0xff] %vm1008, %v1002
        %1068 = vst.msk [vmem:[%s199 + $0x1d8] sm:$0xff] %vm1008, %v1003
        %1069 = vst.msk [vmem:[%s199 + $0x1e0] sm:$0xff] %vm1008, %v1004
        %1070 = vst.msk [vmem:[%s199 + $0x1e8] sm:$0xff] %vm1008, %v1005
        %1071 = vst.msk [vmem:[%s199 + $0x1f0] sm:$0xff] %vm1008, %v1006
        %1072 = vst.msk [vmem:[%s199 + $0x1f8] sm:$0xff] %vm1008, %v1007
        %s1073 = sand.u32 %s112, 1
        %s1074 = sand.u32 %s112, 1
        %s1075 = smul.addr %s1074, 512
        %s1076 = scalar_lea.vmem [#allocation2], %s1075
        // Predicated region
        $region37: #{tpu_custom_call.1} parent=35 // pred_check
          %p1077 = pneg %p122
        $region38: #{tpu_custom_call.1} parent=35 // pred_check_branch
          %1079 = sbr.rel (%p1077) target = $region40
        $region39: #{tpu_custom_call.1} parent=35 // pred_region
          %s1080 = smul.u32 64, %s15
          %s1081 = ssub.s32 100, %s1080
          %p1082 = scmp.lt.s32.totalorder %s1081, 64
          %s1083 = scalar_select %p1082, %s1081, 64
          %s1084 = smul.u32 128, %s1083
          %p1085 = scmp.ne.s32.totalorder 0, %s1084
          %s1086 = smul.addr %s1080, 8
          %s1087 = scalar_lea.vmem %s4, %s1086
          // Predicated region
          $region41: #{tpu_custom_call.1} parent=39 // pred_check
            %p1088 = pneg %p1085
          $region42: #{tpu_custom_call.1} parent=39 // pred_check_branch
            %1090 = sbr.rel (%p1088) target = $region44
          $region43: #{tpu_custom_call.1} parent=39 // pred_region
            // Predicated region
            $region45: #{tpu_custom_call.1} parent=43 // pred_check
              _
            $region46: #{tpu_custom_call.1} parent=43 // pred_check_branch
              %1092 = sbr.rel (0) target = $region48
            $region47: #{tpu_custom_call.1} parent=43 // pred_region
              // Predicated region
              $region67: #{tpu_custom_call.1} parent=47 // pred_check
                _
              $region68: #{tpu_custom_call.1} parent=47 // pred_check_branch
                %1267 = sbr.rel (0) target = $region70
              $region69: #{tpu_custom_call.1} parent=47 // pred_region
                %s1268 = sshrl.u32 %s1083, 6
                // While loop
                $region71: #{tpu_custom_call.1} parent=69 // loop_pre_header
                  _
                $region72: #{tpu_custom_call.1} parent=69 // loop_header
                  %s1270 = sphi 0, %s1272
                  %p1271 = scmp.ge.s32.totalorder %s1270, %s1268
                  %s1275 = sphi 0, %s1408
                  %s1276 = sphi %s1076, %s1411
                  %s1277 = sphi %s1087, %s1412
                $region73: #{tpu_custom_call.1} parent=69 // loop_header_branch
                  %1274 = sbr.rel (%p1271) target = $region77
                $region74: #{tpu_custom_call.1} parent=69 // loop_body
                  %v1278 = vld [vmem:[%s1276] sm:$0xff]
                  %1279 = vst [vmem:[%s1277] sm:$0xff] %v1278
                  %v1280 = vld [vmem:[%s1276 + $0x8] sm:$0xff]
                  %1281 = vst [vmem:[%s1277 + $0x8] sm:$0xff] %v1280
                  %v1282 = vld [vmem:[%s1276 + $0x10] sm:$0xff]
                  %1283 = vst [vmem:[%s1277 + $0x10] sm:$0xff] %v1282
                  %v1284 = vld [vmem:[%s1276 + $0x18] sm:$0xff]
                  %1285 = vst [vmem:[%s1277 + $0x18] sm:$0xff] %v1284
                  %v1286 = vld [vmem:[%s1276 + $0x20] sm:$0xff]
                  %1287 = vst [vmem:[%s1277 + $0x20] sm:$0xff] %v1286
                  %v1288 = vld [vmem:[%s1276 + $0x28] sm:$0xff]
                  %1289 = vst [vmem:[%s1277 + $0x28] sm:$0xff] %v1288
                  %v1290 = vld [vmem:[%s1276 + $0x30] sm:$0xff]
                  %1291 = vst [vmem:[%s1277 + $0x30] sm:$0xff] %v1290
                  %v1292 = vld [vmem:[%s1276 + $0x38] sm:$0xff]
                  %1293 = vst [vmem:[%s1277 + $0x38] sm:$0xff] %v1292
                  %v1294 = vld [vmem:[%s1276 + $0x40] sm:$0xff]
                  %1295 = vst [vmem:[%s1277 + $0x40] sm:$0xff] %v1294
                  %v1296 = vld [vmem:[%s1276 + $0x48] sm:$0xff]
                  %1297 = vst [vmem:[%s1277 + $0x48] sm:$0xff] %v1296
                  %v1298 = vld [vmem:[%s1276 + $0x50] sm:$0xff]
                  %1299 = vst [vmem:[%s1277 + $0x50] sm:$0xff] %v1298
                  %v1300 = vld [vmem:[%s1276 + $0x58] sm:$0xff]
                  %1301 = vst [vmem:[%s1277 + $0x58] sm:$0xff] %v1300
                  %v1302 = vld [vmem:[%s1276 + $0x60] sm:$0xff]
                  %1303 = vst [vmem:[%s1277 + $0x60] sm:$0xff] %v1302
                  %v1304 = vld [vmem:[%s1276 + $0x68] sm:$0xff]
                  %1305 = vst [vmem:[%s1277 + $0x68] sm:$0xff] %v1304
                  %v1306 = vld [vmem:[%s1276 + $0x70] sm:$0xff]
                  %1307 = vst [vmem:[%s1277 + $0x70] sm:$0xff] %v1306
                  %v1308 = vld [vmem:[%s1276 + $0x78] sm:$0xff]
                  %1309 = vst [vmem:[%s1277 + $0x78] sm:$0xff] %v1308
                  %v1310 = vld [vmem:[%s1276 + $0x80] sm:$0xff]
                  %1311 = vst [vmem:[%s1277 + $0x80] sm:$0xff] %v1310
                  %v1312 = vld [vmem:[%s1276 + $0x88] sm:$0xff]
                  %1313 = vst [vmem:[%s1277 + $0x88] sm:$0xff] %v1312
                  %v1314 = vld [vmem:[%s1276 + $0x90] sm:$0xff]
                  %1315 = vst [vmem:[%s1277 + $0x90] sm:$0xff] %v1314
                  %v1316 = vld [vmem:[%s1276 + $0x98] sm:$0xff]
                  %1317 = vst [vmem:[%s1277 + $0x98] sm:$0xff] %v1316
                  %v1318 = vld [vmem:[%s1276 + $0xa0] sm:$0xff]
                  %1319 = vst [vmem:[%s1277 + $0xa0] sm:$0xff] %v1318
                  %v1320 = vld [vmem:[%s1276 + $0xa8] sm:$0xff]
                  %1321 = vst [vmem:[%s1277 + $0xa8] sm:$0xff] %v1320
                  %v1322 = vld [vmem:[%s1276 + $0xb0] sm:$0xff]
                  %1323 = vst [vmem:[%s1277 + $0xb0] sm:$0xff] %v1322
                  %v1324 = vld [vmem:[%s1276 + $0xb8] sm:$0xff]
                  %1325 = vst [vmem:[%s1277 + $0xb8] sm:$0xff] %v1324
                  %v1326 = vld [vmem:[%s1276 + $0xc0] sm:$0xff]
                  %1327 = vst [vmem:[%s1277 + $0xc0] sm:$0xff] %v1326
                  %v1328 = vld [vmem:[%s1276 + $0xc8] sm:$0xff]
                  %1329 = vst [vmem:[%s1277 + $0xc8] sm:$0xff] %v1328
                  %v1330 = vld [vmem:[%s1276 + $0xd0] sm:$0xff]
                  %1331 = vst [vmem:[%s1277 + $0xd0] sm:$0xff] %v1330
                  %v1332 = vld [vmem:[%s1276 + $0xd8] sm:$0xff]
                  %1333 = vst [vmem:[%s1277 + $0xd8] sm:$0xff] %v1332
                  %v1334 = vld [vmem:[%s1276 + $0xe0] sm:$0xff]
                  %1335 = vst [vmem:[%s1277 + $0xe0] sm:$0xff] %v1334
                  %v1336 = vld [vmem:[%s1276 + $0xe8] sm:$0xff]
                  %1337 = vst [vmem:[%s1277 + $0xe8] sm:$0xff] %v1336
                  %v1338 = vld [vmem:[%s1276 + $0xf0] sm:$0xff]
                  %1339 = vst [vmem:[%s1277 + $0xf0] sm:$0xff] %v1338
                  %v1340 = vld [vmem:[%s1276 + $0xf8] sm:$0xff]
                  %1341 = vst [vmem:[%s1277 + $0xf8] sm:$0xff] %v1340
                  %v1342 = vld [vmem:[%s1276 + $0x100] sm:$0xff]
                  %1343 = vst [vmem:[%s1277 + $0x100] sm:$0xff] %v1342
                  %v1344 = vld [vmem:[%s1276 + $0x108] sm:$0xff]
                  %1345 = vst [vmem:[%s1277 + $0x108] sm:$0xff] %v1344
                  %v1346 = vld [vmem:[%s1276 + $0x110] sm:$0xff]
                  %1347 = vst [vmem:[%s1277 + $0x110] sm:$0xff] %v1346
                  %v1348 = vld [vmem:[%s1276 + $0x118] sm:$0xff]
                  %1349 = vst [vmem:[%s1277 + $0x118] sm:$0xff] %v1348
                  %v1350 = vld [vmem:[%s1276 + $0x120] sm:$0xff]
                  %1351 = vst [vmem:[%s1277 + $0x120] sm:$0xff] %v1350
                  %v1352 = vld [vmem:[%s1276 + $0x128] sm:$0xff]
                  %1353 = vst [vmem:[%s1277 + $0x128] sm:$0xff] %v1352
                  %v1354 = vld [vmem:[%s1276 + $0x130] sm:$0xff]
                  %1355 = vst [vmem:[%s1277 + $0x130] sm:$0xff] %v1354
                  %v1356 = vld [vmem:[%s1276 + $0x138] sm:$0xff]
                  %1357 = vst [vmem:[%s1277 + $0x138] sm:$0xff] %v1356
                  %v1358 = vld [vmem:[%s1276 + $0x140] sm:$0xff]
                  %1359 = vst [vmem:[%s1277 + $0x140] sm:$0xff] %v1358
                  %v1360 = vld [vmem:[%s1276 + $0x148] sm:$0xff]
                  %1361 = vst [vmem:[%s1277 + $0x148] sm:$0xff] %v1360
                  %v1362 = vld [vmem:[%s1276 + $0x150] sm:$0xff]
                  %1363 = vst [vmem:[%s1277 + $0x150] sm:$0xff] %v1362
                  %v1364 = vld [vmem:[%s1276 + $0x158] sm:$0xff]
                  %1365 = vst [vmem:[%s1277 + $0x158] sm:$0xff] %v1364
                  %v1366 = vld [vmem:[%s1276 + $0x160] sm:$0xff]
                  %1367 = vst [vmem:[%s1277 + $0x160] sm:$0xff] %v1366
                  %v1368 = vld [vmem:[%s1276 + $0x168] sm:$0xff]
                  %1369 = vst [vmem:[%s1277 + $0x168] sm:$0xff] %v1368
                  %v1370 = vld [vmem:[%s1276 + $0x170] sm:$0xff]
                  %1371 = vst [vmem:[%s1277 + $0x170] sm:$0xff] %v1370
                  %v1372 = vld [vmem:[%s1276 + $0x178] sm:$0xff]
                  %1373 = vst [vmem:[%s1277 + $0x178] sm:$0xff] %v1372
                  %v1374 = vld [vmem:[%s1276 + $0x180] sm:$0xff]
                  %1375 = vst [vmem:[%s1277 + $0x180] sm:$0xff] %v1374
                  %v1376 = vld [vmem:[%s1276 + $0x188] sm:$0xff]
                  %1377 = vst [vmem:[%s1277 + $0x188] sm:$0xff] %v1376
                  %v1378 = vld [vmem:[%s1276 + $0x190] sm:$0xff]
                  %1379 = vst [vmem:[%s1277 + $0x190] sm:$0xff] %v1378
                  %v1380 = vld [vmem:[%s1276 + $0x198] sm:$0xff]
                  %1381 = vst [vmem:[%s1277 + $0x198] sm:$0xff] %v1380
                  %v1382 = vld [vmem:[%s1276 + $0x1a0] sm:$0xff]
                  %1383 = vst [vmem:[%s1277 + $0x1a0] sm:$0xff] %v1382
                  %v1384 = vld [vmem:[%s1276 + $0x1a8] sm:$0xff]
                  %1385 = vst [vmem:[%s1277 + $0x1a8] sm:$0xff] %v1384
                  %v1386 = vld [vmem:[%s1276 + $0x1b0] sm:$0xff]
                  %1387 = vst [vmem:[%s1277 + $0x1b0] sm:$0xff] %v1386
                  %v1388 = vld [vmem:[%s1276 + $0x1b8] sm:$0xff]
                  %1389 = vst [vmem:[%s1277 + $0x1b8] sm:$0xff] %v1388
                  %v1390 = vld [vmem:[%s1276 + $0x1c0] sm:$0xff]
                  %1391 = vst [vmem:[%s1277 + $0x1c0] sm:$0xff] %v1390
                  %v1392 = vld [vmem:[%s1276 + $0x1c8] sm:$0xff]
                  %1393 = vst [vmem:[%s1277 + $0x1c8] sm:$0xff] %v1392
                  %v1394 = vld [vmem:[%s1276 + $0x1d0] sm:$0xff]
                  %1395 = vst [vmem:[%s1277 + $0x1d0] sm:$0xff] %v1394
                  %v1396 = vld [vmem:[%s1276 + $0x1d8] sm:$0xff]
                  %1397 = vst [vmem:[%s1277 + $0x1d8] sm:$0xff] %v1396
                  %v1398 = vld [vmem:[%s1276 + $0x1e0] sm:$0xff]
                  %1399 = vst [vmem:[%s1277 + $0x1e0] sm:$0xff] %v1398
                  %v1400 = vld [vmem:[%s1276 + $0x1e8] sm:$0xff]
                  %1401 = vst [vmem:[%s1277 + $0x1e8] sm:$0xff] %v1400
                  %v1402 = vld [vmem:[%s1276 + $0x1f0] sm:$0xff]
                  %1403 = vst [vmem:[%s1277 + $0x1f0] sm:$0xff] %v1402
                  %v1404 = vld [vmem:[%s1276 + $0x1f8] sm:$0xff]
                  %1405 = vst [vmem:[%s1277 + $0x1f8] sm:$0xff] %v1404
                  %s1406 = sadd.s32 1, %s1275
                  %p1407 = scmp.ge.s32.totalorder %s1406, %s1268
                  %s1408 = scalar_select %p1407, 0, %s1406
                  %s1409 = smul.u32 %s1408, 512
                  %s1410 = smul.u32 %s1408, 512
                  %s1411 = scalar_lea.vmem %s1076, %s1409 [#allocation2]
                  %s1412 = scalar_lea.vmem %s1087, %s1410
                $region75: #{tpu_custom_call.1} parent=69 // loop_footer
                  %s1272 = sadd.s32 %s1270, 1
                $region76: #{tpu_custom_call.1} parent=69 // loop_footer_branch
                  %1269 = sbr.rel target = $region72
                $region77: #{tpu_custom_call.1} parent=69 // loop_exit
                  _
                %s1413 = sshrl.u32 %s1083, 6
                %s1414 = sand.u32 %s1083, 63
                %s1415 = smul.u32 %s1413, 64
                %s1416 = smul.u32 8, %s1415
                %s1417 = scalar_lea.vmem %s1076, %s1416 [#allocation2]
                %s1418 = smul.u32 8, %s1415
                %s1419 = scalar_lea.vmem %s1087, %s1418
                // While loop
                $region78: #{tpu_custom_call.1} parent=69 // loop_pre_header
                  _
                $region79: #{tpu_custom_call.1} parent=69 // loop_header
                  %s1421 = sphi 0, %s1423
                  %p1422 = scmp.ge.s32.totalorder %s1421, %s1414
                  %s1426 = sphi 0, %s1433
                  %s1427 = sphi %s1417, %s1436
                  %s1428 = sphi %s1419, %s1437
                $region80: #{tpu_custom_call.1} parent=69 // loop_header_branch
                  %1425 = sbr.rel (%p1422) target = $region84
                $region81: #{tpu_custom_call.1} parent=69 // loop_body
                  %v1429 = vld [vmem:[%s1427] sm:$0xff]
                  %1430 = vst [vmem:[%s1428] sm:$0xff] %v1429
                  %s1431 = sadd.s32 1, %s1426
                  %p1432 = scmp.ge.s32.totalorder %s1431, %s1414
                  %s1433 = scalar_select %p1432, 0, %s1431
                  %s1434 = smul.u32 %s1433, 8
                  %s1435 = smul.u32 %s1433, 8
                  %s1436 = scalar_lea.vmem %s1417, %s1434 [#allocation2]
                  %s1437 = scalar_lea.vmem %s1419, %s1435
                $region82: #{tpu_custom_call.1} parent=69 // loop_footer
                  %s1423 = sadd.s32 %s1421, 1
                $region83: #{tpu_custom_call.1} parent=69 // loop_footer_branch
                  %1420 = sbr.rel target = $region79
                $region84: #{tpu_custom_call.1} parent=69 // loop_exit
                  _
              $region70: #{tpu_custom_call.1} parent=47 // pred_fallthru
                _
              // Predicated region
              $region85: #{tpu_custom_call.1} parent=47 // pred_check
                _
              $region86: #{tpu_custom_call.1} parent=47 // pred_check_branch
                %1439 = sbr.rel target = $region88
              $region87: #{tpu_custom_call.1} parent=47 // pred_region
                _
              $region88: #{tpu_custom_call.1} parent=47 // pred_fallthru
                _
            $region48: #{tpu_custom_call.1} parent=43 // pred_fallthru
              _
            // Predicated region
            $region49: #{tpu_custom_call.1} parent=43 // pred_check
              _
            $region50: #{tpu_custom_call.1} parent=43 // pred_check_branch
              %1094 = sbr.rel target = $region52
            $region51: #{tpu_custom_call.1} parent=43 // pred_region
              %s1096 = sshrl.u32 %s1083, 6
              // While loop
              $region53: #{tpu_custom_call.1} parent=51 // loop_pre_header
                _
              $region54: #{tpu_custom_call.1} parent=51 // loop_header
                %s1098 = sphi 0, %s1100
                %p1099 = scmp.ge.s32.totalorder %s1098, %s1096
                %s1103 = sphi 0, %s1236
                %s1104 = sphi %s1076, %s1239
                %s1105 = sphi %s1087, %s1240
              $region55: #{tpu_custom_call.1} parent=51 // loop_header_branch
                %1102 = sbr.rel (%p1099) target = $region59
              $region56: #{tpu_custom_call.1} parent=51 // loop_body
                %v1106 = vld [vmem:[%s1104] sm:$0xff]
                %1107 = vst [vmem:[%s1105] sm:$0xff] %v1106
                %v1108 = vld [vmem:[%s1104 + $0x8] sm:$0xff]
                %1109 = vst [vmem:[%s1105 + $0x8] sm:$0xff] %v1108
                %v1110 = vld [vmem:[%s1104 + $0x10] sm:$0xff]
                %1111 = vst [vmem:[%s1105 + $0x10] sm:$0xff] %v1110
                %v1112 = vld [vmem:[%s1104 + $0x18] sm:$0xff]
                %1113 = vst [vmem:[%s1105 + $0x18] sm:$0xff] %v1112
                %v1114 = vld [vmem:[%s1104 + $0x20] sm:$0xff]
                %1115 = vst [vmem:[%s1105 + $0x20] sm:$0xff] %v1114
                %v1116 = vld [vmem:[%s1104 + $0x28] sm:$0xff]
                %1117 = vst [vmem:[%s1105 + $0x28] sm:$0xff] %v1116
                %v1118 = vld [vmem:[%s1104 + $0x30] sm:$0xff]
                %1119 = vst [vmem:[%s1105 + $0x30] sm:$0xff] %v1118
                %v1120 = vld [vmem:[%s1104 + $0x38] sm:$0xff]
                %1121 = vst [vmem:[%s1105 + $0x38] sm:$0xff] %v1120
                %v1122 = vld [vmem:[%s1104 + $0x40] sm:$0xff]
                %1123 = vst [vmem:[%s1105 + $0x40] sm:$0xff] %v1122
                %v1124 = vld [vmem:[%s1104 + $0x48] sm:$0xff]
                %1125 = vst [vmem:[%s1105 + $0x48] sm:$0xff] %v1124
                %v1126 = vld [vmem:[%s1104 + $0x50] sm:$0xff]
                %1127 = vst [vmem:[%s1105 + $0x50] sm:$0xff] %v1126
                %v1128 = vld [vmem:[%s1104 + $0x58] sm:$0xff]
                %1129 = vst [vmem:[%s1105 + $0x58] sm:$0xff] %v1128
                %v1130 = vld [vmem:[%s1104 + $0x60] sm:$0xff]
                %1131 = vst [vmem:[%s1105 + $0x60] sm:$0xff] %v1130
                %v1132 = vld [vmem:[%s1104 + $0x68] sm:$0xff]
                %1133 = vst [vmem:[%s1105 + $0x68] sm:$0xff] %v1132
                %v1134 = vld [vmem:[%s1104 + $0x70] sm:$0xff]
                %1135 = vst [vmem:[%s1105 + $0x70] sm:$0xff] %v1134
                %v1136 = vld [vmem:[%s1104 + $0x78] sm:$0xff]
                %1137 = vst [vmem:[%s1105 + $0x78] sm:$0xff] %v1136
                %v1138 = vld [vmem:[%s1104 + $0x80] sm:$0xff]
                %1139 = vst [vmem:[%s1105 + $0x80] sm:$0xff] %v1138
                %v1140 = vld [vmem:[%s1104 + $0x88] sm:$0xff]
                %1141 = vst [vmem:[%s1105 + $0x88] sm:$0xff] %v1140
                %v1142 = vld [vmem:[%s1104 + $0x90] sm:$0xff]
                %1143 = vst [vmem:[%s1105 + $0x90] sm:$0xff] %v1142
                %v1144 = vld [vmem:[%s1104 + $0x98] sm:$0xff]
                %1145 = vst [vmem:[%s1105 + $0x98] sm:$0xff] %v1144
                %v1146 = vld [vmem:[%s1104 + $0xa0] sm:$0xff]
                %1147 = vst [vmem:[%s1105 + $0xa0] sm:$0xff] %v1146
                %v1148 = vld [vmem:[%s1104 + $0xa8] sm:$0xff]
                %1149 = vst [vmem:[%s1105 + $0xa8] sm:$0xff] %v1148
                %v1150 = vld [vmem:[%s1104 + $0xb0] sm:$0xff]
                %1151 = vst [vmem:[%s1105 + $0xb0] sm:$0xff] %v1150
                %v1152 = vld [vmem:[%s1104 + $0xb8] sm:$0xff]
                %1153 = vst [vmem:[%s1105 + $0xb8] sm:$0xff] %v1152
                %v1154 = vld [vmem:[%s1104 + $0xc0] sm:$0xff]
                %1155 = vst [vmem:[%s1105 + $0xc0] sm:$0xff] %v1154
                %v1156 = vld [vmem:[%s1104 + $0xc8] sm:$0xff]
                %1157 = vst [vmem:[%s1105 + $0xc8] sm:$0xff] %v1156
                %v1158 = vld [vmem:[%s1104 + $0xd0] sm:$0xff]
                %1159 = vst [vmem:[%s1105 + $0xd0] sm:$0xff] %v1158
                %v1160 = vld [vmem:[%s1104 + $0xd8] sm:$0xff]
                %1161 = vst [vmem:[%s1105 + $0xd8] sm:$0xff] %v1160
                %v1162 = vld [vmem:[%s1104 + $0xe0] sm:$0xff]
                %1163 = vst [vmem:[%s1105 + $0xe0] sm:$0xff] %v1162
                %v1164 = vld [vmem:[%s1104 + $0xe8] sm:$0xff]
                %1165 = vst [vmem:[%s1105 + $0xe8] sm:$0xff] %v1164
                %v1166 = vld [vmem:[%s1104 + $0xf0] sm:$0xff]
                %1167 = vst [vmem:[%s1105 + $0xf0] sm:$0xff] %v1166
                %v1168 = vld [vmem:[%s1104 + $0xf8] sm:$0xff]
                %1169 = vst [vmem:[%s1105 + $0xf8] sm:$0xff] %v1168
                %v1170 = vld [vmem:[%s1104 + $0x100] sm:$0xff]
                %1171 = vst [vmem:[%s1105 + $0x100] sm:$0xff] %v1170
                %v1172 = vld [vmem:[%s1104 + $0x108] sm:$0xff]
                %1173 = vst [vmem:[%s1105 + $0x108] sm:$0xff] %v1172
                %v1174 = vld [vmem:[%s1104 + $0x110] sm:$0xff]
                %1175 = vst [vmem:[%s1105 + $0x110] sm:$0xff] %v1174
                %v1176 = vld [vmem:[%s1104 + $0x118] sm:$0xff]
                %1177 = vst [vmem:[%s1105 + $0x118] sm:$0xff] %v1176
                %v1178 = vld [vmem:[%s1104 + $0x120] sm:$0xff]
                %1179 = vst [vmem:[%s1105 + $0x120] sm:$0xff] %v1178
                %v1180 = vld [vmem:[%s1104 + $0x128] sm:$0xff]
                %1181 = vst [vmem:[%s1105 + $0x128] sm:$0xff] %v1180
                %v1182 = vld [vmem:[%s1104 + $0x130] sm:$0xff]
                %1183 = vst [vmem:[%s1105 + $0x130] sm:$0xff] %v1182
                %v1184 = vld [vmem:[%s1104 + $0x138] sm:$0xff]
                %1185 = vst [vmem:[%s1105 + $0x138] sm:$0xff] %v1184
                %v1186 = vld [vmem:[%s1104 + $0x140] sm:$0xff]
                %1187 = vst [vmem:[%s1105 + $0x140] sm:$0xff] %v1186
                %v1188 = vld [vmem:[%s1104 + $0x148] sm:$0xff]
                %1189 = vst [vmem:[%s1105 + $0x148] sm:$0xff] %v1188
                %v1190 = vld [vmem:[%s1104 + $0x150] sm:$0xff]
                %1191 = vst [vmem:[%s1105 + $0x150] sm:$0xff] %v1190
                %v1192 = vld [vmem:[%s1104 + $0x158] sm:$0xff]
                %1193 = vst [vmem:[%s1105 + $0x158] sm:$0xff] %v1192
                %v1194 = vld [vmem:[%s1104 + $0x160] sm:$0xff]
                %1195 = vst [vmem:[%s1105 + $0x160] sm:$0xff] %v1194
                %v1196 = vld [vmem:[%s1104 + $0x168] sm:$0xff]
                %1197 = vst [vmem:[%s1105 + $0x168] sm:$0xff] %v1196
                %v1198 = vld [vmem:[%s1104 + $0x170] sm:$0xff]
                %1199 = vst [vmem:[%s1105 + $0x170] sm:$0xff] %v1198
                %v1200 = vld [vmem:[%s1104 + $0x178] sm:$0xff]
                %1201 = vst [vmem:[%s1105 + $0x178] sm:$0xff] %v1200
                %v1202 = vld [vmem:[%s1104 + $0x180] sm:$0xff]
                %1203 = vst [vmem:[%s1105 + $0x180] sm:$0xff] %v1202
                %v1204 = vld [vmem:[%s1104 + $0x188] sm:$0xff]
                %1205 = vst [vmem:[%s1105 + $0x188] sm:$0xff] %v1204
                %v1206 = vld [vmem:[%s1104 + $0x190] sm:$0xff]
                %1207 = vst [vmem:[%s1105 + $0x190] sm:$0xff] %v1206
                %v1208 = vld [vmem:[%s1104 + $0x198] sm:$0xff]
                %1209 = vst [vmem:[%s1105 + $0x198] sm:$0xff] %v1208
                %v1210 = vld [vmem:[%s1104 + $0x1a0] sm:$0xff]
                %1211 = vst [vmem:[%s1105 + $0x1a0] sm:$0xff] %v1210
                %v1212 = vld [vmem:[%s1104 + $0x1a8] sm:$0xff]
                %1213 = vst [vmem:[%s1105 + $0x1a8] sm:$0xff] %v1212
                %v1214 = vld [vmem:[%s1104 + $0x1b0] sm:$0xff]
                %1215 = vst [vmem:[%s1105 + $0x1b0] sm:$0xff] %v1214
                %v1216 = vld [vmem:[%s1104 + $0x1b8] sm:$0xff]
                %1217 = vst [vmem:[%s1105 + $0x1b8] sm:$0xff] %v1216
                %v1218 = vld [vmem:[%s1104 + $0x1c0] sm:$0xff]
                %1219 = vst [vmem:[%s1105 + $0x1c0] sm:$0xff] %v1218
                %v1220 = vld [vmem:[%s1104 + $0x1c8] sm:$0xff]
                %1221 = vst [vmem:[%s1105 + $0x1c8] sm:$0xff] %v1220
                %v1222 = vld [vmem:[%s1104 + $0x1d0] sm:$0xff]
                %1223 = vst [vmem:[%s1105 + $0x1d0] sm:$0xff] %v1222
                %v1224 = vld [vmem:[%s1104 + $0x1d8] sm:$0xff]
                %1225 = vst [vmem:[%s1105 + $0x1d8] sm:$0xff] %v1224
                %v1226 = vld [vmem:[%s1104 + $0x1e0] sm:$0xff]
                %1227 = vst [vmem:[%s1105 + $0x1e0] sm:$0xff] %v1226
                %v1228 = vld [vmem:[%s1104 + $0x1e8] sm:$0xff]
                %1229 = vst [vmem:[%s1105 + $0x1e8] sm:$0xff] %v1228
                %v1230 = vld [vmem:[%s1104 + $0x1f0] sm:$0xff]
                %1231 = vst [vmem:[%s1105 + $0x1f0] sm:$0xff] %v1230
                %v1232 = vld [vmem:[%s1104 + $0x1f8] sm:$0xff]
                %1233 = vst [vmem:[%s1105 + $0x1f8] sm:$0xff] %v1232
                %s1234 = sadd.s32 1, %s1103
                %p1235 = scmp.ge.s32.totalorder %s1234, %s1096
                %s1236 = scalar_select %p1235, 0, %s1234
                %s1237 = smul.u32 %s1236, 512
                %s1238 = smul.u32 %s1236, 512
                %s1239 = scalar_lea.vmem %s1076, %s1237 [#allocation2]
                %s1240 = scalar_lea.vmem %s1087, %s1238
              $region57: #{tpu_custom_call.1} parent=51 // loop_footer
                %s1100 = sadd.s32 %s1098, 1
              $region58: #{tpu_custom_call.1} parent=51 // loop_footer_branch
                %1097 = sbr.rel target = $region54
              $region59: #{tpu_custom_call.1} parent=51 // loop_exit
                _
              %s1241 = sshrl.u32 %s1083, 6
              %s1242 = sand.u32 %s1083, 63
              %s1243 = smul.u32 %s1241, 64
              %s1244 = smul.u32 8, %s1243
              %s1245 = scalar_lea.vmem %s1076, %s1244 [#allocation2]
              %s1246 = smul.u32 8, %s1243
              %s1247 = scalar_lea.vmem %s1087, %s1246
              // While loop
              $region60: #{tpu_custom_call.1} parent=51 // loop_pre_header
                _
              $region61: #{tpu_custom_call.1} parent=51 // loop_header
                %s1249 = sphi 0, %s1251
                %p1250 = scmp.ge.s32.totalorder %s1249, %s1242
                %s1254 = sphi 0, %s1261
                %s1255 = sphi %s1245, %s1264
                %s1256 = sphi %s1247, %s1265
              $region62: #{tpu_custom_call.1} parent=51 // loop_header_branch
                %1253 = sbr.rel (%p1250) target = $region66
              $region63: #{tpu_custom_call.1} parent=51 // loop_body
                %v1257 = vld [vmem:[%s1255] sm:$0xff]
                %1258 = vst [vmem:[%s1256] sm:$0xff] %v1257
                %s1259 = sadd.s32 1, %s1254
                %p1260 = scmp.ge.s32.totalorder %s1259, %s1242
                %s1261 = scalar_select %p1260, 0, %s1259
                %s1262 = smul.u32 %s1261, 8
                %s1263 = smul.u32 %s1261, 8
                %s1264 = scalar_lea.vmem %s1245, %s1262 [#allocation2]
                %s1265 = scalar_lea.vmem %s1247, %s1263
              $region64: #{tpu_custom_call.1} parent=51 // loop_footer
                %s1251 = sadd.s32 %s1249, 1
              $region65: #{tpu_custom_call.1} parent=51 // loop_footer_branch
                %1248 = sbr.rel target = $region61
              $region66: #{tpu_custom_call.1} parent=51 // loop_exit
                _
            $region52: #{tpu_custom_call.1} parent=43 // pred_fallthru
              _
          $region44: #{tpu_custom_call.1} parent=39 // pred_fallthru
            _
          %1440 = vnop
        $region40: #{tpu_custom_call.1} parent=35 // pred_fallthru
          _
      $region36: #{tpu_custom_call.1} parent=5 // pred_fallthru
        _
      %p1441 = scmp.le.s32.totalorder 2, %s10
      // Predicated region
      $region89: #{tpu_custom_call.1} parent=5 // pred_check
        %p1442 = pneg %p1441
      $region90: #{tpu_custom_call.1} parent=5 // pred_check_branch
        %1444 = sbr.rel (%p1442) target = $region92
      $region91: #{tpu_custom_call.1} parent=5 // pred_region
        %s1445 = ssub.s32 %s10, 2
        // Predicated region
        $region93: #{tpu_custom_call.1} parent=91 // pred_check
          %p1446 = pneg %p128
        $region94: #{tpu_custom_call.1} parent=91 // pred_check_branch
          %1448 = sbr.rel (%p1446) target = $region96
        $region95: #{tpu_custom_call.1} parent=91 // pred_region
          %s1449 = sand.u32 %s113, 1
          %s1450 = sand.u32 %s113, 1
          %s1451 = smul.addr %s1450, 512
          %s1452 = scalar_lea.vmem [#allocation2], %s1451
        $region96: #{tpu_custom_call.1} parent=91 // pred_fallthru
          _
      $region92: #{tpu_custom_call.1} parent=5 // pred_fallthru
        _
    $region6: #{tpu_custom_call.1} parent=1 // loop_footer
      %s14 = sadd.s32 1, %s10
    $region7: #{tpu_custom_call.1} parent=1 // loop_footer_branch
      %9 = sbr.rel target = $region3
    $region8: #{tpu_custom_call.1} parent=1 // loop_exit
      _

</llo_original>
